<compile_context>
chip_gen: v7x
topology: tpu7x:2x2x1
jax: 0.10.0
libtpu: 0.0.40
codegen_flags: <defaults>
</compile_context>

<pallas_src>
import functools
import numpy as np
import jax
import jax.numpy as jnp
from jax.experimental import pallas as pl
from jax.experimental.pallas import tpu as pltpu


# ----------------------- anchor utilities (plain numpy glue) -----------------------
def generate_anchor(base_size=16, ratios=(0.5, 1.0, 2.0), scales=(8, 16, 32)):
    py = base_size / 2.0
    px = base_size / 2.0
    anchor_base = np.zeros((len(ratios) * len(scales), 4), dtype=np.float32)
    for i, r in enumerate(ratios):
        for j, s in enumerate(scales):
            h = base_size * s * np.sqrt(r)
            w = base_size * s * np.sqrt(1.0 / r)
            idx = i * len(scales) + j
            anchor_base[idx, 0] = py - h / 2.0
            anchor_base[idx, 1] = px - w / 2.0
            anchor_base[idx, 2] = py + h / 2.0
            anchor_base[idx, 3] = px + w / 2.0
    return anchor_base


def _enumerate_shifted_anchor(anchor_base, feat_stride, height, width):
    shift_y = np.arange(0, height * feat_stride, feat_stride)
    shift_x = np.arange(0, width * feat_stride, feat_stride)
    shift_x, shift_y = np.meshgrid(shift_x, shift_y)
    shift = np.stack((shift_y.ravel(), shift_x.ravel(),
                      shift_y.ravel(), shift_x.ravel()), axis=1)
    A = anchor_base.shape[0]
    K = shift.shape[0]
    anchor = anchor_base.reshape((1, A, 4)) + shift.reshape((1, K, 4)).transpose((1, 0, 2))
    anchor = anchor.reshape((K * A, 4)).astype(np.float32)
    return anchor


# ------------------------------- Pallas kernel --------------------------------------
def _rpn_kernel(A, p_ref, w1_ref, b1_ref, wh_ref, bh_ref, out_ref):
    """Fused conv1(3x3 as im2col matmul)+ReLU -> fused loc/score head -> fg softmax.

    p_ref  : (TM, 9*Cin)   bf16 im2col patches
    w1_ref : (9*Cin, Cmid) bf16
    b1_ref : (1, Cmid)     f32
    wh_ref : (Cmid, 128)   bf16  [0:4A loc | 4A:6A score | 6A:7A bg | 7A:8A fg | pad]
    bh_ref : (1, 128)      f32
    out_ref: (TM, 128)     f32   [0:4A loc | 4A:6A score | 6A:7A fg prob | junk/pad]
    """
    # conv1 as a single K=9*Cin MXU matmul, f32 accumulate, bias + ReLU in f32.
    acc = jnp.dot(p_ref[...], w1_ref[...], preferred_element_type=jnp.float32)
    hidden = jnp.maximum(acc + b1_ref[...], 0.0)

    # Single fused 1x1 head matmul (lane-dense, N=128).
    head = jnp.dot(hidden.astype(jnp.bfloat16), wh_ref[...],
                   preferred_element_type=jnp.float32) + bh_ref[...]

    # Foreground probability: 2-way softmax over (bg, fg) == sigmoid(fg - bg).
    c_loc_score = 6 * A          # 54
    c_bg_end = 7 * A             # 63
    c_fg_end = 8 * A             # 72
    s0 = head[:, c_loc_score:c_bg_end]     # bg logits (de-interleaved copy)
    s1 = head[:, c_bg_end:c_fg_end]        # fg logits (de-interleaved copy)
    fg = pl.reciprocal(1.0 + jnp.exp(s0 - s1), approx=False)

    # One dense 128-lane store: loc | score | fg | leftover.
    out_ref[...] = jnp.concatenate(
        [head[:, :c_loc_score], fg, head[:, c_bg_end:]], axis=-1)


# ------------------------- jitted device-side compute --------------------------------
@functools.partial(jax.jit, static_argnames=("tile_m",))
def _rpn_compute(x_nchw, params, tile_m):
    n, Cin, H, W = x_nchw.shape
    A = 9
    Cmid = params["w1"].shape[-1]
    HW = H * W
    K9 = 9 * Cin
    HEAD_W = 128

    # --- glue: NCHW -> NHWC, zero pad, im2col to (n*HW, 9*Cin), cast to bf16 ---
    x = jnp.transpose(x_nchw, (0, 2, 3, 1)).astype(jnp.float32)
    xpad = jnp.pad(x, ((0, 0), (1, 1), (1, 1), (0, 0)))
    patches = jnp.concatenate(
        [xpad[:, dy:dy + H, dx:dx + W, :] for dy in range(3) for dx in range(3)],
        axis=-1).reshape(n * HW, K9).astype(jnp.bfloat16)

    # conv1 weight flattened to (9*Cin, Cmid); tap order matches the patch order.
    w1 = params["w1"].reshape(K9, Cmid).astype(jnp.bfloat16)
    b1 = params["b1"].reshape(1, Cmid).astype(jnp.float32)

    # Fused 1x1 head weight, padded to 128 lanes:
    #   cols 0:4A   loc (dy,dx,dh,dw per anchor, PyTorch channel order)
    #   cols 4A:6A  score ((bg,fg) interleaved, PyTorch channel order)
    #   cols 6A:7A  bg logits (de-interleaved copy, free: same MXU push)
    #   cols 7A:8A  fg logits (de-interleaved copy)
    #   cols 8A:128 zero padding
    wl, bl = params["wl"], params["bl"]
    ws, bs = params["ws"], params["bs"]
    wh = jnp.zeros((Cmid, HEAD_W), jnp.float32)
    wh = wh.at[:, 0:4 * A].set(wl)
    wh = wh.at[:, 4 * A:6 * A].set(ws)
    wh = wh.at[:, 6 * A:7 * A].set(ws[:, 0::2])
    wh = wh.at[:, 7 * A:8 * A].set(ws[:, 1::2])
    wh = wh.astype(jnp.bfloat16)
    bh = jnp.zeros((1, HEAD_W), jnp.float32)
    bh = bh.at[:, 0:4 * A].set(bl)
    bh = bh.at[:, 4 * A:6 * A].set(bs)
    bh = bh.at[:, 6 * A:7 * A].set(bs[:, 0::2])
    bh = bh.at[:, 7 * A:8 * A].set(bs[:, 1::2])

    # --- batch folded into rows; tile rows for the grid ---
    rows = n * HW
    tm = min(tile_m, rows)
    tm = max(8, (tm // 8) * 8)                  # sublane-aligned
    padded = pl.cdiv(rows, tm) * tm
    if padded != rows:
        patches = jnp.pad(patches, ((0, padded - rows), (0, 0)))
    grid = (padded // tm,)

    kernel = functools.partial(_rpn_kernel, A)
    slab = pl.pallas_call(
        kernel,
        out_shape=jax.ShapeDtypeStruct((padded, HEAD_W), jnp.float32),
        grid=grid,
        in_specs=[
            pl.BlockSpec((tm, K9), lambda i: (i, 0)),
            pl.BlockSpec((K9, Cmid), lambda i: (0, 0)),
            pl.BlockSpec((1, Cmid), lambda i: (0, 0)),
            pl.BlockSpec((Cmid, HEAD_W), lambda i: (0, 0)),
            pl.BlockSpec((1, HEAD_W), lambda i: (0, 0)),
        ],
        out_specs=pl.BlockSpec((tm, HEAD_W), lambda i: (i, 0)),
        compiler_params=pltpu.CompilerParams(
            dimension_semantics=("parallel",),
            vmem_limit_bytes=64 * 1024 * 1024,
        ),
    )(patches, w1, b1, wh, bh)

    # Carve up the lane-dense slab (same layout as permute(0,2,3,1).view(...)).
    slab = slab[:rows]
    rpn_locs = slab[:, 0:4 * A].reshape(n, HW * A, 4)
    rpn_scores = slab[:, 4 * A:6 * A].reshape(n, HW * A, 2)
    rpn_fg_scores = slab[:, 6 * A:7 * A].reshape(n, HW * A)
    return rpn_locs, rpn_scores, rpn_fg_scores


# ------------------------------------ wrapper ----------------------------------------
def rpn_forward(x_nchw, params, img_size, feat_stride=16, scale=1.0, tile_m=512):
    """Reproduces Region_Proposal_Network.forward (minus Proposal_Creator)."""
    del img_size, scale  # only used by Proposal_Creator (not implemented)
    _, _, H, W = x_nchw.shape

    # Anchors (numpy, exactly as in the reference module).
    anchor = _enumerate_shifted_anchor(generate_anchor(), feat_stride, H, W)

    rpn_locs, rpn_scores, rpn_fg_scores = _rpn_compute(x_nchw, params, tile_m)
    # TODO(synk): rois / roi_indices require Proposal_Creator (NMS) — not implemented.
    return rpn_locs, rpn_scores, rpn_fg_scores, anchor


# ------------------------------ pure-JAX reference ----------------------------------
def rpn_reference(x_nchw, params):
    """Same math (bf16 matmul operands, f32 accumulate) in plain JAX."""
    n, Cin, H, W = x_nchw.shape
    A = 9
    x = jnp.transpose(x_nchw, (0, 2, 3, 1)).astype(jnp.float32)
    xpad = jnp.pad(x, ((0, 0), (1, 1), (1, 1), (0, 0)))
    patches = jnp.concatenate(
        [xpad[:, dy:dy + H, dx:dx + W, :] for dy in range(3) for dx in range(3)],
        axis=-1).reshape(n, H * W, 9 * Cin).astype(jnp.bfloat16)
    w1 = params["w1"].reshape(9 * Cin, -1).astype(jnp.bfloat16)
    hidden = jnp.einsum("npk,ko->npo", patches, w1,
                        preferred_element_type=jnp.float32) + params["b1"][0]
    hidden = jnp.maximum(hidden, 0.0)
    hb = hidden.astype(jnp.bfloat16)
    loc = jnp.einsum("npc,co->npo", hb, params["wl"].astype(jnp.bfloat16),
                     preferred_element_type=jnp.float32) + params["bl"][0]
    score = jnp.einsum("npc,co->npo", hb, params["ws"].astype(jnp.bfloat16),
                       preferred_element_type=jnp.float32) + params["bs"][0]
    fg = jax.nn.softmax(score.reshape(n, H * W, A, 2), axis=-1)[..., 1]
    return loc.reshape(n, -1, 4), score.reshape(n, -1, 2), fg.reshape(n, -1)


# ----------------------------------- main --------------------------------------------
if __name__ == "__main__":
    # Small shapes consistent with the module: n=2, in_channels=16, mid=32, feat 16x16.
    n, Cin, Cmid, H, W, A = 2, 16, 32, 16, 16, 9
    feat_stride = 16
    img_size = (H * feat_stride, W * feat_stride)

    key = jax.random.PRNGKey(0)
    k1, k2, k3, kx = jax.random.split(key, 4)
    # weight_initialize(module, 0, 0.01): N(0, 0.01) weights, zero bias.
    params = {
        "w1": 0.01 * jax.random.normal(k1, (3, 3, Cin, Cmid), jnp.float32),
        "b1": jnp.zeros((1, Cmid), jnp.float32),
        "ws": 0.01 * jax.random.normal(k2, (Cmid, 2 * A), jnp.float32),
        "bs": jnp.zeros((1, 2 * A), jnp.float32),
        "wl": 0.01 * jax.random.normal(k3, (Cmid, 4 * A), jnp.float32),
        "bl": jnp.zeros((1, 4 * A), jnp.float32),
    }
    x = jax.random.normal(kx, (n, Cin, H, W), jnp.float32)

    rpn_locs, rpn_scores, rpn_fg_scores, anchor = rpn_forward(
        x, params, img_size, feat_stride=feat_stride, scale=1.0)
    jax.block_until_ready((rpn_locs, rpn_scores, rpn_fg_scores))

    # Sanity checks against a pure-JAX reference.
    ref_locs, ref_scores, ref_fg = rpn_reference(x, params)
    assert rpn_locs.shape == (n, H * W * A, 4)
    assert rpn_scores.shape == (n, H * W * A, 2)
    assert rpn_fg_scores.shape == (n, H * W * A)
    assert anchor.shape == (H * W * A, 4)
    np.testing.assert_allclose(np.asarray(rpn_locs), np.asarray(ref_locs),
                               atol=1e-4, rtol=1e-3)
    np.testing.assert_allclose(np.asarray(rpn_scores), np.asarray(ref_scores),
                               atol=1e-4, rtol=1e-3)
    np.testing.assert_allclose(np.asarray(rpn_fg_scores), np.asarray(ref_fg),
                               atol=1e-4, rtol=1e-3)

    print("KERNEL_OK")
</pallas_src>

<mosaic_0001>
module attributes {stable_mosaic.version = 11 : i64} {
  func.func @_rpn_kernel(%arg0: i32, %arg1: memref<512x144xbf16, #tpu.memory_space<vmem>>, %arg2: memref<144x32xbf16, #tpu.memory_space<vmem>>, %arg3: memref<1x32xf32, #tpu.memory_space<vmem>>, %arg4: memref<32x128xbf16, #tpu.memory_space<vmem>>, %arg5: memref<1x128xf32, #tpu.memory_space<vmem>>, %arg6: memref<512x128xf32, #tpu.memory_space<vmem>>) attributes {dimension_semantics = [#tpu.dimension_semantics<parallel>], iteration_bounds = array<i64: 1>, scalar_prefetch = 0 : i64, scratch_operands = 0 : i64, tpu.core_type = #tpu.core_type<tc>, window_params = [{transform_indices = @transform_0, window_bounds = array<i64: 512, 144>}, {pipeline_mode = #tpu.pipeline_mode<synchronous>, transform_indices = @transform_1, window_bounds = array<i64: 144, 32>}, {pipeline_mode = #tpu.pipeline_mode<synchronous>, transform_indices = @transform_2, window_bounds = array<i64: 1, 32>}, {pipeline_mode = #tpu.pipeline_mode<synchronous>, transform_indices = @transform_3, window_bounds = array<i64: 32, 128>}, {pipeline_mode = #tpu.pipeline_mode<synchronous>, transform_indices = @transform_4, window_bounds = array<i64: 1, 128>}, {transform_indices = @transform_5, window_bounds = array<i64: 512, 128>}]} {
    %c0 = arith.constant 0 : index
    %c0_0 = arith.constant 0 : index
    %0 = vector.load %arg1[%c0, %c0_0] : memref<512x144xbf16, #tpu.memory_space<vmem>>, vector<512x144xbf16>
    %c0_1 = arith.constant 0 : index
    %c0_2 = arith.constant 0 : index
    %1 = vector.load %arg2[%c0_1, %c0_2] : memref<144x32xbf16, #tpu.memory_space<vmem>>, vector<144x32xbf16>
    %cst = arith.constant dense<0.000000e+00> : vector<512x32xf32>
    %2 = tpu.matmul %0, %1, %cst {dimension_numbers = #tpu.dot_dimension_numbers<[1], [0], [0], [1], [0, 0, 1, 1], [], []>} : vector<512x144xbf16>, vector<144x32xbf16>, vector<512x32xf32> -> vector<512x32xf32>
    %c0_3 = arith.constant 0 : index
    %c0_4 = arith.constant 0 : index
    %3 = vector.load %arg3[%c0_3, %c0_4] : memref<1x32xf32, #tpu.memory_space<vmem>>, vector<1x32xf32>
    %4 = vector.broadcast %3 : vector<1x32xf32> to vector<512x32xf32>
    %5 = arith.addf %2, %4 : vector<512x32xf32>
    %cst_5 = arith.constant 0.000000e+00 : f32
    %6 = vector.broadcast %cst_5 : f32 to vector<512x32xf32>
    %7 = arith.maximumf %5, %6 : vector<512x32xf32>
    %8 = arith.truncf %7 : vector<512x32xf32> to vector<512x32xbf16>
    %c0_6 = arith.constant 0 : index
    %c0_7 = arith.constant 0 : index
    %9 = vector.load %arg4[%c0_6, %c0_7] : memref<32x128xbf16, #tpu.memory_space<vmem>>, vector<32x128xbf16>
    %cst_8 = arith.constant dense<0.000000e+00> : vector<512x128xf32>
    %10 = tpu.matmul %8, %9, %cst_8 {dimension_numbers = #tpu.dot_dimension_numbers<[1], [0], [0], [1], [0, 0, 1, 1], [], []>} : vector<512x32xbf16>, vector<32x128xbf16>, vector<512x128xf32> -> vector<512x128xf32>
    %c0_9 = arith.constant 0 : index
    %c0_10 = arith.constant 0 : index
    %11 = vector.load %arg5[%c0_9, %c0_10] : memref<1x128xf32, #tpu.memory_space<vmem>>, vector<1x128xf32>
    %12 = vector.broadcast %11 : vector<1x128xf32> to vector<512x128xf32>
    %13 = arith.addf %10, %12 : vector<512x128xf32>
    %14 = vector.extract_strided_slice %13 {offsets = [0, 54], sizes = [512, 9], strides = [1, 1]} : vector<512x128xf32> to vector<512x9xf32>
    %15 = vector.extract_strided_slice %13 {offsets = [0, 63], sizes = [512, 9], strides = [1, 1]} : vector<512x128xf32> to vector<512x9xf32>
    %16 = arith.subf %14, %15 : vector<512x9xf32>
    %17 = math.exp %16 : vector<512x9xf32>
    %cst_11 = arith.constant 1.000000e+00 : f32
    %18 = vector.broadcast %cst_11 : f32 to vector<512x9xf32>
    %19 = arith.addf %18, %17 : vector<512x9xf32>
    %20 = tpu.reciprocal %19 : vector<512x9xf32> -> vector<512x9xf32>
    %21 = vector.extract_strided_slice %13 {offsets = [0, 0], sizes = [512, 54], strides = [1, 1]} : vector<512x128xf32> to vector<512x54xf32>
    %22 = vector.extract_strided_slice %13 {offsets = [0, 63], sizes = [512, 65], strides = [1, 1]} : vector<512x128xf32> to vector<512x65xf32>
    %23 = tpu.concatenate %21, %20, %22 in 1 : vector<512x54xf32>, vector<512x9xf32>, vector<512x65xf32> -> vector<512x128xf32>
    %c0_12 = arith.constant 0 : index
    %c0_13 = arith.constant 0 : index
    %24 = vector.load %arg6[%c0_12, %c0_13] : memref<512x128xf32, #tpu.memory_space<vmem>>, vector<512x128xf32>
    tpu.vector_store %arg6[%c0_12, %c0_13], %23 {strides = array<i32>} : memref<512x128xf32, #tpu.memory_space<vmem>>, vector<512x128xf32>,
    return
  }
  func.func @transform_0(%arg0: i32) -> (i32, i32) {
    %c0_i32 = arith.constant 0 : i32
    %c0_i32_0 = arith.constant 0 : i32
    return %arg0, %c0_i32 : i32, i32
  }
  func.func @transform_1(%arg0: i32) -> (i32, i32) {
    %c0_i32 = arith.constant 0 : i32
    %c0_i32_0 = arith.constant 0 : i32
    %c0_i32_1 = arith.constant 0 : i32
    return %c0_i32, %c0_i32_0 : i32, i32
  }
  func.func @transform_2(%arg0: i32) -> (i32, i32) {
    %c0_i32 = arith.constant 0 : i32
    %c0_i32_0 = arith.constant 0 : i32
    %c0_i32_1 = arith.constant 0 : i32
    return %c0_i32, %c0_i32_0 : i32, i32
  }
  func.func @transform_3(%arg0: i32) -> (i32, i32) {
    %c0_i32 = arith.constant 0 : i32
    %c0_i32_0 = arith.constant 0 : i32
    %c0_i32_1 = arith.constant 0 : i32
    return %c0_i32, %c0_i32_0 : i32, i32
  }
  func.func @transform_4(%arg0: i32) -> (i32, i32) {
    %c0_i32 = arith.constant 0 : i32
    %c0_i32_0 = arith.constant 0 : i32
    %c0_i32_1 = arith.constant 0 : i32
    return %c0_i32, %c0_i32_0 : i32, i32
  }
  func.func @transform_5(%arg0: i32) -> (i32, i32) {
    %c0_i32 = arith.constant 0 : i32
    %c0_i32_0 = arith.constant 0 : i32
    return %arg0, %c0_i32 : i32, i32
  }
}

</mosaic_0001>

<llo_original>
// kernel: _rpn_compute.1
$region0: #{_rpn_compute.1}
  #allocation0 [shape = 'u32[]', space=smem, size = 0x4, offset = 0x4, fixed_abs, tag = 'smem constant byte address 0x4 - core index']
  #allocation1 [shape = 'u32[144,128]{1,0:T(1,128)}', space=vmem, size = 0x12000, scoped, tag = 'internal scratch']
  %s0 = inlined_call_operand.hbm [shape: bf16[512,144], index: 0, kind: input, shape index: {}]
  %s1 = inlined_call_operand.hbm [shape: bf16[144,32], index: 1, kind: input, shape index: {}]
  %s2 = inlined_call_operand.hbm [shape: f32[1,32], index: 2, kind: input, shape index: {}]
  %s3 = inlined_call_operand.hbm [shape: bf16[32,128], index: 3, kind: input, shape index: {}]
  %s4 = inlined_call_operand.hbm [shape: f32[1,128], index: 4, kind: input, shape index: {}]
  %s5 = inlined_call_operand.hbm [shape: f32[512,128], index: 5, kind: output, shape index: {}]
  %s6 = sld [smem:[#allocation0]]
  $region50: #{_rpn_compute.1} parent=0
    _
  %s8 = ssub.s32 1, %s6
  %s9 = scalar_select 0, %s8, %s6
  $region1: #{_rpn_compute.1} parent=0
    #allocation2 [shape = 'u8[262144]{0}', space=vmem, size = 0x40000, scoped, tag = 'input window, operand 0, single buffered']
    #allocation3 [shape = 's32[1]{0}', space=sflag, size = 0x4, scoped, tag = 'scoped memory for _rpn_compute.1']
    #allocation4 [shape = 's32[1]{0}', space=sflag, size = 0x4, scoped, tag = 'scoped memory for _rpn_compute.1']
    #allocation5 [shape = 'u8[36864]{0}', space=vmem, size = 0x9000, scoped, tag = 'input window, operand 1, single buffered']
    #allocation6 [shape = 's32[1]{0}', space=sflag, size = 0x4, scoped, tag = 'scoped memory for _rpn_compute.1']
    #allocation7 [shape = 'u8[512]{0}', space=vmem, size = 0x400, scoped, tag = 'input window, operand 2, single buffered']
    #allocation8 [shape = 'u8[8192]{0}', space=vmem, size = 0x2000, scoped, tag = 'input window, operand 3, single buffered']
    #allocation9 [shape = 's32[1]{0}', space=sflag, size = 0x4, scoped, tag = 'scoped memory for _rpn_compute.1']
    #allocation10 [shape = 'u8[512]{0}', space=vmem, size = 0x400, scoped, tag = 'input window, operand 4, single buffered']
    #allocation11 [shape = 'u8[262144]{0}', space=vmem, size = 0x40000, scoped, tag = 'output window, operand 0, single buffered']
    %10 = vsyncpa [#allocation3], 0
    %11 = vsyncpa [#allocation6], 0
    %12 = vsyncpa [#allocation9], 0
    %13 = vsyncpa [#allocation4], 0
    // Predicated region
    $region2: #{_rpn_compute.1} parent=1 // pred_check
      _
    $region3: #{_rpn_compute.1} parent=1 // pred_check_branch
      %15 = sbr.rel (0) target = $region5
    $region4: #{_rpn_compute.1} parent=1 // pred_region
      %s17 = ssub.s32 8192, 8192
      %18 = vsyncadd [#allocation3], %s17
      %s19 = sshll.u32 [#allocation2], 4
      %s20 = int_to_ptr.vmem [resolvable:$true] %s19
      %25 = dma.hbm_to_vmem [thread:$0]  %s0, 8192, %s20, [#allocation3], 128, 128, 8
    $region5: #{_rpn_compute.1} parent=1 // pred_fallthru
      _
    // Predicated region
    $region6: #{_rpn_compute.1} parent=1 // pred_check
      _
    $region7: #{_rpn_compute.1} parent=1 // pred_check_branch
      %27 = sbr.rel (0) target = $region9
    $region8: #{_rpn_compute.1} parent=1 // pred_region
      %s29 = ssub.s32 1152, 1152
      %30 = vsyncadd [#allocation6], %s29
      %s31 = sshll.u32 [#allocation5], 4
      %s32 = int_to_ptr.vmem [resolvable:$true] %s31
      %37 = dma.hbm_to_vmem [thread:$0]  %s1, 1152, %s32, [#allocation6], 64, 64, 4
    $region9: #{_rpn_compute.1} parent=1 // pred_fallthru
      _
    // Predicated region
    $region10: #{_rpn_compute.1} parent=1 // pred_check
      _
    $region11: #{_rpn_compute.1} parent=1 // pred_check_branch
      %39 = sbr.rel (0) target = $region13
    $region12: #{_rpn_compute.1} parent=1 // pred_region
      %s41 = ssub.s32 16, 16
      %42 = vsyncadd [#allocation6], %s41
      %s44 = sshll.u32 [#allocation7], 4
      %s45 = int_to_ptr.vmem [resolvable:$true] %s44
      %47 = dma.hbm_to_vmem [thread:$0]  %s2, 16, %s45, [#allocation6]
    $region13: #{_rpn_compute.1} parent=1 // pred_fallthru
      _
    // Predicated region
    $region14: #{_rpn_compute.1} parent=1 // pred_check
      _
    $region15: #{_rpn_compute.1} parent=1 // pred_check_branch
      %49 = sbr.rel (0) target = $region17
    $region16: #{_rpn_compute.1} parent=1 // pred_region
      %s51 = ssub.s32 256, 256
      %52 = vsyncadd [#allocation9], %s51
      %s53 = sshll.u32 [#allocation8], 4
      %s54 = int_to_ptr.vmem [resolvable:$true] %s53
      %59 = dma.hbm_to_vmem [thread:$0]  %s3, 256, %s54, [#allocation9], 64, 64, 4
    $region17: #{_rpn_compute.1} parent=1 // pred_fallthru
      _
    // Predicated region
    $region18: #{_rpn_compute.1} parent=1 // pred_check
      _
    $region19: #{_rpn_compute.1} parent=1 // pred_check_branch
      %61 = sbr.rel (0) target = $region21
    $region20: #{_rpn_compute.1} parent=1 // pred_region
      %s63 = ssub.s32 16, 16
      %64 = vsyncadd [#allocation9], %s63
      %s66 = sshll.u32 [#allocation10], 4
      %s67 = int_to_ptr.vmem [resolvable:$true] %s66
      %69 = dma.hbm_to_vmem [thread:$0]  %s4, 16, %s67, [#allocation9]
    $region21: #{_rpn_compute.1} parent=1 // pred_fallthru
      _
    // Predicated region
    $region22: #{_rpn_compute.1} parent=1 // pred_check
      _
    $region23: #{_rpn_compute.1} parent=1 // pred_check_branch
      %71 = sbr.rel (0) target = $region25
    $region24: #{_rpn_compute.1} parent=1 // pred_region
      %72 = dma.done [#allocation3], 8192
    $region25: #{_rpn_compute.1} parent=1 // pred_fallthru
      _
    // Predicated region
    $region26: #{_rpn_compute.1} parent=1 // pred_check
      _
    $region27: #{_rpn_compute.1} parent=1 // pred_check_branch
      %74 = sbr.rel (0) target = $region29
    $region28: #{_rpn_compute.1} parent=1 // pred_region
      %75 = dma.done [#allocation6], 1152
    $region29: #{_rpn_compute.1} parent=1 // pred_fallthru
      _
    // Predicated region
    $region30: #{_rpn_compute.1} parent=1 // pred_check
      _
    $region31: #{_rpn_compute.1} parent=1 // pred_check_branch
      %77 = sbr.rel (0) target = $region33
    $region32: #{_rpn_compute.1} parent=1 // pred_region
      %78 = dma.done [#allocation6], 16
    $region33: #{_rpn_compute.1} parent=1 // pred_fallthru
      _
    // Predicated region
    $region34: #{_rpn_compute.1} parent=1 // pred_check
      _
    $region35: #{_rpn_compute.1} parent=1 // pred_check_branch
      %80 = sbr.rel (0) target = $region37
    $region36: #{_rpn_compute.1} parent=1 // pred_region
      %81 = dma.done [#allocation9], 256
    $region37: #{_rpn_compute.1} parent=1 // pred_fallthru
      _
    // Predicated region
    $region38: #{_rpn_compute.1} parent=1 // pred_check
      _
    $region39: #{_rpn_compute.1} parent=1 // pred_check_branch
      %83 = sbr.rel (0) target = $region41
    $region40: #{_rpn_compute.1} parent=1 // pred_region
      %84 = dma.done [#allocation9], 16
    $region41: #{_rpn_compute.1} parent=1 // pred_fallthru
      _
    %v86 = vld [vmem:[#allocation2] sm:$0xff]
    %v87 = vld [vmem:[#allocation2 + $0x8] sm:$0xff]
    %v88 = vld [vmem:[#allocation2 + $0x10] sm:$0xff]
    %v89 = vld [vmem:[#allocation2 + $0x18] sm:$0xff]
    %v90 = vld [vmem:[#allocation2 + $0x20] sm:$0xff]
    %v91 = vld [vmem:[#allocation2 + $0x28] sm:$0xff]
    %v92 = vld [vmem:[#allocation2 + $0x30] sm:$0xff]
    %v93 = vld [vmem:[#allocation2 + $0x38] sm:$0xff]
    %v94 = vld [vmem:[#allocation2 + $0x40] sm:$0xff]
    %v95 = vld [vmem:[#allocation2 + $0x48] sm:$0xff]
    %v96 = vld [vmem:[#allocation2 + $0x50] sm:$0xff]
    %v97 = vld [vmem:[#allocation2 + $0x58] sm:$0xff]
    %v98 = vld [vmem:[#allocation2 + $0x60] sm:$0xff]
    %v99 = vld [vmem:[#allocation2 + $0x68] sm:$0xff]
    %v100 = vld [vmem:[#allocation2 + $0x70] sm:$0xff]
    %v101 = vld [vmem:[#allocation2 + $0x78] sm:$0xff]
    %v102 = vld [vmem:[#allocation2 + $0x80] sm:$0xff]
    %v103 = vld [vmem:[#allocation2 + $0x88] sm:$0xff]
    %v104 = vld [vmem:[#allocation2 + $0x90] sm:$0xff]
    %v105 = vld [vmem:[#allocation2 + $0x98] sm:$0xff]
    %v106 = vld [vmem:[#allocation2 + $0xa0] sm:$0xff]
    %v107 = vld [vmem:[#allocation2 + $0xa8] sm:$0xff]
    %v108 = vld [vmem:[#allocation2 + $0xb0] sm:$0xff]
    %v109 = vld [vmem:[#allocation2 + $0xb8] sm:$0xff]
    %v110 = vld [vmem:[#allocation2 + $0xc0] sm:$0xff]
    %v111 = vld [vmem:[#allocation2 + $0xc8] sm:$0xff]
    %v112 = vld [vmem:[#allocation2 + $0xd0] sm:$0xff]
    %v113 = vld [vmem:[#allocation2 + $0xd8] sm:$0xff]
    %v114 = vld [vmem:[#allocation2 + $0xe0] sm:$0xff]
    %v115 = vld [vmem:[#allocation2 + $0xe8] sm:$0xff]
    %v116 = vld [vmem:[#allocation2 + $0xf0] sm:$0xff]
    %v117 = vld [vmem:[#allocation2 + $0xf8] sm:$0xff]
    %v118 = vld [vmem:[#allocation2 + $0x100] sm:$0xff]
    %v119 = vld [vmem:[#allocation2 + $0x108] sm:$0xff]
    %v120 = vld [vmem:[#allocation2 + $0x110] sm:$0xff]
    %v121 = vld [vmem:[#allocation2 + $0x118] sm:$0xff]
    %v122 = vld [vmem:[#allocation2 + $0x120] sm:$0xff]
    %v123 = vld [vmem:[#allocation2 + $0x128] sm:$0xff]
    %v124 = vld [vmem:[#allocation2 + $0x130] sm:$0xff]
    %v125 = vld [vmem:[#allocation2 + $0x138] sm:$0xff]
    %v126 = vld [vmem:[#allocation2 + $0x140] sm:$0xff]
    %v127 = vld [vmem:[#allocation2 + $0x148] sm:$0xff]
    %v128 = vld [vmem:[#allocation2 + $0x150] sm:$0xff]
    %v129 = vld [vmem:[#allocation2 + $0x158] sm:$0xff]
    %v130 = vld [vmem:[#allocation2 + $0x160] sm:$0xff]
    %v131 = vld [vmem:[#allocation2 + $0x168] sm:$0xff]
    %v132 = vld [vmem:[#allocation2 + $0x170] sm:$0xff]
    %v133 = vld [vmem:[#allocation2 + $0x178] sm:$0xff]
    %v134 = vld [vmem:[#allocation2 + $0x180] sm:$0xff]
    %v135 = vld [vmem:[#allocation2 + $0x188] sm:$0xff]
    %v136 = vld [vmem:[#allocation2 + $0x190] sm:$0xff]
    %v137 = vld [vmem:[#allocation2 + $0x198] sm:$0xff]
    %v138 = vld [vmem:[#allocation2 + $0x1a0] sm:$0xff]
    %v139 = vld [vmem:[#allocation2 + $0x1a8] sm:$0xff]
    %v140 = vld [vmem:[#allocation2 + $0x1b0] sm:$0xff]
    %v141 = vld [vmem:[#allocation2 + $0x1b8] sm:$0xff]
    %v142 = vld [vmem:[#allocation2 + $0x1c0] sm:$0xff]
    %v143 = vld [vmem:[#allocation2 + $0x1c8] sm:$0xff]
    %v144 = vld [vmem:[#allocation2 + $0x1d0] sm:$0xff]
    %v145 = vld [vmem:[#allocation2 + $0x1d8] sm:$0xff]
    %v146 = vld [vmem:[#allocation2 + $0x1e0] sm:$0xff]
    %v147 = vld [vmem:[#allocation2 + $0x1e8] sm:$0xff]
    %v148 = vld [vmem:[#allocation2 + $0x1f0] sm:$0xff]
    %v149 = vld [vmem:[#allocation2 + $0x1f8] sm:$0xff]
    %v150 = vld [vmem:[#allocation5] sm:$0xf]
    %v151 = vld [vmem:[#allocation5 + $0x4] sm:$0xf]
    %v152 = vld [vmem:[#allocation5 + $0x8] sm:$0xf]
    %v153 = vld [vmem:[#allocation5 + $0xc] sm:$0xf]
    %v154 = vld [vmem:[#allocation5 + $0x10] sm:$0xf]
    %v155 = vld [vmem:[#allocation5 + $0x14] sm:$0xf]
    %v156 = vld [vmem:[#allocation5 + $0x18] sm:$0xf]
    %v157 = vld [vmem:[#allocation5 + $0x1c] sm:$0xf]
    %v158 = vld [vmem:[#allocation5 + $0x20] sm:$0xf]
    %v159 = vld [vmem:[#allocation5 + $0x24] sm:$0xf]
    %v160 = vld [vmem:[#allocation5 + $0x28] sm:$0xf]
    %v161 = vld [vmem:[#allocation5 + $0x2c] sm:$0xf]
    %v162 = vld [vmem:[#allocation5 + $0x30] sm:$0xf]
    %v163 = vld [vmem:[#allocation5 + $0x34] sm:$0xf]
    %v164 = vld [vmem:[#allocation5 + $0x38] sm:$0xf]
    %v165 = vld [vmem:[#allocation5 + $0x3c] sm:$0xf]
    %v166 = vld [vmem:[#allocation5 + $0x40] sm:$0xf]
    %v167 = vld [vmem:[#allocation5 + $0x44] sm:$0xf]
    %v168 = vld [vmem:[#allocation7] sm:$0x1]
    %v170 = vlaneseq
    %v171 = vshrl.u32 %v170, 7
    %v172 = vsub.s32 0, %v171
    %v173 = vrot.slane %v168, %v172
    %v239 = vunpack.c.l.b16 %v86
    %v240 = vunpack.c.h.b16 %v86
    %v241 = vunpack.c.l.b16 %v87
    %v242 = vunpack.c.h.b16 %v87
    %v243 = vunpack.c.l.b16 %v88
    %v244 = vunpack.c.h.b16 %v88
    %v245 = vunpack.c.l.b16 %v89
    %v246 = vunpack.c.h.b16 %v89
    %v247 = vunpack.c.l.b16 %v90
    %v248 = vunpack.c.h.b16 %v90
    %v249 = vunpack.c.l.b16 %v91
    %v250 = vunpack.c.h.b16 %v91
    %v251 = vunpack.c.l.b16 %v92
    %v252 = vunpack.c.h.b16 %v92
    %v253 = vunpack.c.l.b16 %v93
    %v254 = vunpack.c.h.b16 %v93
    %v255 = vunpack.c.l.b16 %v94
    %v256 = vunpack.c.h.b16 %v94
    %v257 = vunpack.c.l.b16 %v95
    %v258 = vunpack.c.h.b16 %v95
    %v259 = vunpack.c.l.b16 %v96
    %v260 = vunpack.c.h.b16 %v96
    %v261 = vunpack.c.l.b16 %v97
    %v262 = vunpack.c.h.b16 %v97
    %v263 = vunpack.c.l.b16 %v98
    %v264 = vunpack.c.h.b16 %v98
    %v265 = vunpack.c.l.b16 %v99
    %v266 = vunpack.c.h.b16 %v99
    %v267 = vunpack.c.l.b16 %v100
    %v268 = vunpack.c.h.b16 %v100
    %v269 = vunpack.c.l.b16 %v101
    %v270 = vunpack.c.h.b16 %v101
    %v271 = vunpack.c.l.b16 %v102
    %v272 = vunpack.c.h.b16 %v102
    %v273 = vunpack.c.l.b16 %v103
    %v274 = vunpack.c.h.b16 %v103
    %v275 = vunpack.c.l.b16 %v104
    %v276 = vunpack.c.h.b16 %v104
    %v277 = vunpack.c.l.b16 %v105
    %v278 = vunpack.c.h.b16 %v105
    %v279 = vunpack.c.l.b16 %v106
    %v280 = vunpack.c.h.b16 %v106
    %v281 = vunpack.c.l.b16 %v107
    %v282 = vunpack.c.h.b16 %v107
    %v283 = vunpack.c.l.b16 %v108
    %v284 = vunpack.c.h.b16 %v108
    %v285 = vunpack.c.l.b16 %v109
    %v286 = vunpack.c.h.b16 %v109
    %v287 = vunpack.c.l.b16 %v110
    %v288 = vunpack.c.h.b16 %v110
    %v289 = vunpack.c.l.b16 %v111
    %v290 = vunpack.c.h.b16 %v111
    %v291 = vunpack.c.l.b16 %v112
    %v292 = vunpack.c.h.b16 %v112
    %v293 = vunpack.c.l.b16 %v113
    %v294 = vunpack.c.h.b16 %v113
    %v295 = vunpack.c.l.b16 %v114
    %v296 = vunpack.c.h.b16 %v114
    %v297 = vunpack.c.l.b16 %v115
    %v298 = vunpack.c.h.b16 %v115
    %v299 = vunpack.c.l.b16 %v116
    %v300 = vunpack.c.h.b16 %v116
    %v301 = vunpack.c.l.b16 %v117
    %v302 = vunpack.c.h.b16 %v117
    %v303 = vunpack.c.l.b16 %v118
    %v304 = vunpack.c.h.b16 %v118
    %v305 = vunpack.c.l.b16 %v119
    %v306 = vunpack.c.h.b16 %v119
    %v307 = vunpack.c.l.b16 %v120
    %v308 = vunpack.c.h.b16 %v120
    %v309 = vunpack.c.l.b16 %v121
    %v310 = vunpack.c.h.b16 %v121
    %v311 = vunpack.c.l.b16 %v122
    %v312 = vunpack.c.h.b16 %v122
    %v313 = vunpack.c.l.b16 %v123
    %v314 = vunpack.c.h.b16 %v123
    %v315 = vunpack.c.l.b16 %v124
    %v316 = vunpack.c.h.b16 %v124
    %v317 = vunpack.c.l.b16 %v125
    %v318 = vunpack.c.h.b16 %v125
    %v319 = vunpack.c.l.b16 %v126
    %v320 = vunpack.c.h.b16 %v126
    %v321 = vunpack.c.l.b16 %v127
    %v322 = vunpack.c.h.b16 %v127
    %v323 = vunpack.c.l.b16 %v128
    %v324 = vunpack.c.h.b16 %v128
    %v325 = vunpack.c.l.b16 %v129
    %v326 = vunpack.c.h.b16 %v129
    %v327 = vunpack.c.l.b16 %v130
    %v328 = vunpack.c.h.b16 %v130
    %v329 = vunpack.c.l.b16 %v131
    %v330 = vunpack.c.h.b16 %v131
    %v331 = vunpack.c.l.b16 %v132
    %v332 = vunpack.c.h.b16 %v132
    %v333 = vunpack.c.l.b16 %v133
    %v334 = vunpack.c.h.b16 %v133
    %v335 = vunpack.c.l.b16 %v134
    %v336 = vunpack.c.h.b16 %v134
    %v337 = vunpack.c.l.b16 %v135
    %v338 = vunpack.c.h.b16 %v135
    %v339 = vunpack.c.l.b16 %v136
    %v340 = vunpack.c.h.b16 %v136
    %v341 = vunpack.c.l.b16 %v137
    %v342 = vunpack.c.h.b16 %v137
    %v343 = vunpack.c.l.b16 %v138
    %v344 = vunpack.c.h.b16 %v138
    %v345 = vunpack.c.l.b16 %v139
    %v346 = vunpack.c.h.b16 %v139
    %v347 = vunpack.c.l.b16 %v140
    %v348 = vunpack.c.h.b16 %v140
    %v349 = vunpack.c.l.b16 %v141
    %v350 = vunpack.c.h.b16 %v141
    %v351 = vunpack.c.l.b16 %v142
    %v352 = vunpack.c.h.b16 %v142
    %v353 = vunpack.c.l.b16 %v143
    %v354 = vunpack.c.h.b16 %v143
    %v355 = vunpack.c.l.b16 %v144
    %v356 = vunpack.c.h.b16 %v144
    %v357 = vunpack.c.l.b16 %v145
    %v358 = vunpack.c.h.b16 %v145
    %v359 = vunpack.c.l.b16 %v146
    %v360 = vunpack.c.h.b16 %v146
    %v361 = vunpack.c.l.b16 %v147
    %v362 = vunpack.c.h.b16 %v147
    %v363 = vunpack.c.l.b16 %v148
    %v364 = vunpack.c.h.b16 %v148
    %v365 = vunpack.c.l.b16 %v149
    %v366 = vunpack.c.h.b16 %v149
    %v367 = vpack.c.b16 %v241, %v239
    %v368 = vpack.c.b16 %v242, %v240
    %v369 = vpack.c.b16 %v245, %v243
    %v370 = vpack.c.b16 %v246, %v244
    %v371 = vpack.c.b16 %v249, %v247
    %v372 = vpack.c.b16 %v250, %v248
    %v373 = vpack.c.b16 %v253, %v251
    %v374 = vpack.c.b16 %v254, %v252
    %v375 = vpack.c.b16 %v257, %v255
    %v376 = vpack.c.b16 %v258, %v256
    %v377 = vpack.c.b16 %v261, %v259
    %v378 = vpack.c.b16 %v262, %v260
    %v379 = vpack.c.b16 %v265, %v263
    %v380 = vpack.c.b16 %v266, %v264
    %v381 = vpack.c.b16 %v269, %v267
    %v382 = vpack.c.b16 %v270, %v268
    %v383 = vpack.c.b16 %v273, %v271
    %v384 = vpack.c.b16 %v274, %v272
    %v385 = vpack.c.b16 %v277, %v275
    %v386 = vpack.c.b16 %v278, %v276
    %v387 = vpack.c.b16 %v281, %v279
    %v388 = vpack.c.b16 %v282, %v280
    %v389 = vpack.c.b16 %v285, %v283
    %v390 = vpack.c.b16 %v286, %v284
    %v391 = vpack.c.b16 %v289, %v287
    %v392 = vpack.c.b16 %v290, %v288
    %v393 = vpack.c.b16 %v293, %v291
    %v394 = vpack.c.b16 %v294, %v292
    %v395 = vpack.c.b16 %v297, %v295
    %v396 = vpack.c.b16 %v298, %v296
    %v397 = vpack.c.b16 %v301, %v299
    %v398 = vpack.c.b16 %v302, %v300
    %v399 = vpack.c.b16 %v305, %v303
    %v400 = vpack.c.b16 %v306, %v304
    %v401 = vpack.c.b16 %v309, %v307
    %v402 = vpack.c.b16 %v310, %v308
    %v403 = vpack.c.b16 %v313, %v311
    %v404 = vpack.c.b16 %v314, %v312
    %v405 = vpack.c.b16 %v317, %v315
    %v406 = vpack.c.b16 %v318, %v316
    %v407 = vpack.c.b16 %v321, %v319
    %v408 = vpack.c.b16 %v322, %v320
    %v409 = vpack.c.b16 %v325, %v323
    %v410 = vpack.c.b16 %v326, %v324
    %v411 = vpack.c.b16 %v329, %v327
    %v412 = vpack.c.b16 %v330, %v328
    %v413 = vpack.c.b16 %v333, %v331
    %v414 = vpack.c.b16 %v334, %v332
    %v415 = vpack.c.b16 %v337, %v335
    %v416 = vpack.c.b16 %v338, %v336
    %v417 = vpack.c.b16 %v341, %v339
    %v418 = vpack.c.b16 %v342, %v340
    %v419 = vpack.c.b16 %v345, %v343
    %v420 = vpack.c.b16 %v346, %v344
    %v421 = vpack.c.b16 %v349, %v347
    %v422 = vpack.c.b16 %v350, %v348
    %v423 = vpack.c.b16 %v353, %v351
    %v424 = vpack.c.b16 %v354, %v352
    %v425 = vpack.c.b16 %v357, %v355
    %v426 = vpack.c.b16 %v358, %v356
    %v427 = vpack.c.b16 %v361, %v359
    %v428 = vpack.c.b16 %v362, %v360
    %v429 = vpack.c.b16 %v365, %v363
    %v430 = vpack.c.b16 %v366, %v364
    %v481 = vunpack.c.l.b16 %v150
    %v482 = vunpack.c.l.b16 %v151
    %v483 = vunpack.c.l.b16 %v152
    %v484 = vunpack.c.l.b16 %v153
    %v485 = vunpack.c.l.b16 %v154
    %v486 = vunpack.c.l.b16 %v155
    %v487 = vunpack.c.l.b16 %v156
    %v488 = vunpack.c.l.b16 %v157
    %v489 = vunpack.c.l.b16 %v158
    %v490 = vunpack.c.l.b16 %v159
    %v491 = vunpack.c.l.b16 %v160
    %v492 = vunpack.c.l.b16 %v161
    %v493 = vunpack.c.l.b16 %v162
    %v494 = vunpack.c.l.b16 %v163
    %v495 = vunpack.c.l.b16 %v164
    %v496 = vunpack.c.l.b16 %v165
    %v497 = vunpack.c.l.b16 %v166
    %v498 = vunpack.c.l.b16 %v167
    %v499 = vpack.c.b16 %v482, %v481
    %v500 = vpack.c.b16 %v484, %v483
    %v501 = vpack.c.b16 %v486, %v485
    %v502 = vpack.c.b16 %v488, %v487
    %v503 = vpack.c.b16 %v490, %v489
    %v504 = vpack.c.b16 %v492, %v491
    %v505 = vpack.c.b16 %v494, %v493
    %v506 = vpack.c.b16 %v496, %v495
    %v507 = vpack.c.b16 %v498, %v497
    %vm517 = vcmask 130048
    %v519 = vsel %vm517, %v368, 0
    %v522 = vsel %vm517, %v370, 0
    %v525 = vsel %vm517, %v372, 0
    %v528 = vsel %vm517, %v374, 0
    %v531 = vsel %vm517, %v376, 0
    %v534 = vsel %vm517, %v378, 0
    %v537 = vsel %vm517, %v380, 0
    %v540 = vsel %vm517, %v382, 0
    %v543 = vsel %vm517, %v384, 0
    %v546 = vsel %vm517, %v386, 0
    %v549 = vsel %vm517, %v388, 0
    %v552 = vsel %vm517, %v390, 0
    %v555 = vsel %vm517, %v392, 0
    %v558 = vsel %vm517, %v394, 0
    %v561 = vsel %vm517, %v396, 0
    %v564 = vsel %vm517, %v398, 0
    %v567 = vsel %vm517, %v400, 0
    %v570 = vsel %vm517, %v402, 0
    %v573 = vsel %vm517, %v404, 0
    %v576 = vsel %vm517, %v406, 0
    %v579 = vsel %vm517, %v408, 0
    %v582 = vsel %vm517, %v410, 0
    %v585 = vsel %vm517, %v412, 0
    %v588 = vsel %vm517, %v414, 0
    %v591 = vsel %vm517, %v416, 0
    %v594 = vsel %vm517, %v418, 0
    %v597 = vsel %vm517, %v420, 0
    %v600 = vsel %vm517, %v422, 0
    %v603 = vsel %vm517, %v424, 0
    %v606 = vsel %vm517, %v426, 0
    %v609 = vsel %vm517, %v428, 0
    %v612 = vsel %vm517, %v430, 0
    %614 = vmatprep.subr.bf16.mxu0 0
    %615 = vmatpush1.bf16.msra.mxu0 %v499
    %616 = vmatprep.subr.bf16.mxu0 0
    %617 = vmatpush1.bf16.msra.mxu0 %v500
    %618 = vmatprep.subr.bf16.mxu0 0
    %619 = vmatpush1.bf16.msra.mxu0 %v501
    %620 = vmatprep.subr.bf16.mxu0 0
    %621 = vmatpush1.bf16.msra.mxu0 %v502
    %622 = vmatprep.subr.bf16.mxu0 0
    %623 = vmatpush1.bf16.msra.mxu0 %v503
    %624 = vmatprep.subr.bf16.mxu0 0
    %625 = vmatpush1.bf16.msra.mxu0 %v504
    %626 = vmatprep.subr.bf16.mxu0 0
    %627 = vmatpush1.bf16.msra.mxu0 %v505
    %628 = vmatprep.subr.bf16.mxu0 0
    %629 = vmatpush1.bf16.msra.mxu0 %v506
    %630 = vmatprep.subr.bf16.mxu0 0
    %631 = vmatpush1.bf16.msra.mxu0 %v507
    %632 = vmatprep.subr.bf16.mxu0 0
    %633 = vmatpush1.bf16.msra.mxu0 0
    %634 = vmatprep.subr.bf16.mxu0 0
    %635 = vmatpush1.bf16.msra.mxu0 0
    %636 = vmatprep.subr.bf16.mxu0 0
    %637 = vmatpush1.bf16.msra.mxu0 0
    %638 = vmatprep.subr.bf16.mxu0 0
    %639 = vmatpush1.bf16.msra.mxu0 0
    %640 = vmatprep.subr.bf16.mxu0 0
    %641 = vmatpush1.bf16.msra.mxu0 0
    %642 = vmatprep.subr.bf16.mxu0 0
    %643 = vmatpush1.bf16.msra.mxu0 0
    %644 = vmatprep.subr.bf16.mxu0 0
    %645 = vmatpush1.bf16.msra.mxu0 0
    %646 = vmatprep.mubr.bf16.mxu0 %v519
    %647 = vmatmul.mubr.bf16.gmra.mrb[0].mxu0 %v367
    %v648 = vpop.f32.mrb[0].mxu0
    %v649 = vadd.f32 %v173, %v648
    %v650 = vpop.f32.mrb[0].mxu0
    %v651 = vpop.f32.mrb[0].mxu0
    %v652 = vadd.f32 %v173, %v651
    %v653 = vpop.f32.mrb[0].mxu0
    %654 = vmatprep.mubr.bf16.mxu0 %v522
    %655 = vmatmul.mubr.bf16.gmra.mrb[0].mxu0 %v369
    %v656 = vpop.f32.mrb[0].mxu0
    %v657 = vadd.f32 %v173, %v656
    %v658 = vpop.f32.mrb[0].mxu0
    %v659 = vpop.f32.mrb[0].mxu0
    %v660 = vadd.f32 %v173, %v659
    %v661 = vpop.f32.mrb[0].mxu0
    %662 = vmatprep.mubr.bf16.mxu0 %v525
    %663 = vmatmul.mubr.bf16.gmra.mrb[0].mxu0 %v371
    %v664 = vpop.f32.mrb[0].mxu0
    %v665 = vadd.f32 %v173, %v664
    %v666 = vpop.f32.mrb[0].mxu0
    %v667 = vpop.f32.mrb[0].mxu0
    %v668 = vadd.f32 %v173, %v667
    %v669 = vpop.f32.mrb[0].mxu0
    %670 = vmatprep.mubr.bf16.mxu0 %v528
    %671 = vmatmul.mubr.bf16.gmra.mrb[0].mxu0 %v373
    %v672 = vpop.f32.mrb[0].mxu0
    %v673 = vadd.f32 %v173, %v672
    %v674 = vpop.f32.mrb[0].mxu0
    %v675 = vpop.f32.mrb[0].mxu0
    %v676 = vadd.f32 %v173, %v675
    %v677 = vpop.f32.mrb[0].mxu0
    %678 = vmatprep.mubr.bf16.mxu0 %v531
    %679 = vmatmul.mubr.bf16.gmra.mrb[0].mxu0 %v375
    %v680 = vpop.f32.mrb[0].mxu0
    %v681 = vadd.f32 %v173, %v680
    %v682 = vpop.f32.mrb[0].mxu0
    %v683 = vpop.f32.mrb[0].mxu0
    %v684 = vadd.f32 %v173, %v683
    %v685 = vpop.f32.mrb[0].mxu0
    %686 = vmatprep.mubr.bf16.mxu0 %v534
    %687 = vmatmul.mubr.bf16.gmra.mrb[0].mxu0 %v377
    %v688 = vpop.f32.mrb[0].mxu0
    %v689 = vadd.f32 %v173, %v688
    %v690 = vpop.f32.mrb[0].mxu0
    %v691 = vpop.f32.mrb[0].mxu0
    %v692 = vadd.f32 %v173, %v691
    %v693 = vpop.f32.mrb[0].mxu0
    %694 = vmatprep.mubr.bf16.mxu0 %v537
    %695 = vmatmul.mubr.bf16.gmra.mrb[0].mxu0 %v379
    %v696 = vpop.f32.mrb[0].mxu0
    %v697 = vadd.f32 %v173, %v696
    %v698 = vpop.f32.mrb[0].mxu0
    %v699 = vpop.f32.mrb[0].mxu0
    %v700 = vadd.f32 %v173, %v699
    %v701 = vpop.f32.mrb[0].mxu0
    %702 = vmatprep.mubr.bf16.mxu0 %v540
    %703 = vmatmul.mubr.bf16.gmra.mrb[0].mxu0 %v381
    %v704 = vpop.f32.mrb[0].mxu0
    %v705 = vadd.f32 %v173, %v704
    %v706 = vpop.f32.mrb[0].mxu0
    %v707 = vpop.f32.mrb[0].mxu0
    %v708 = vadd.f32 %v173, %v707
    %v709 = vpop.f32.mrb[0].mxu0
    %710 = vmatprep.mubr.bf16.mxu0 %v543
    %711 = vmatmul.mubr.bf16.gmra.mrb[0].mxu0 %v383
    %v712 = vpop.f32.mrb[0].mxu0
    %v713 = vadd.f32 %v173, %v712
    %v714 = vpop.f32.mrb[0].mxu0
    %v715 = vpop.f32.mrb[0].mxu0
    %v716 = vadd.f32 %v173, %v715
    %v717 = vpop.f32.mrb[0].mxu0
    %718 = vmatprep.mubr.bf16.mxu0 %v546
    %719 = vmatmul.mubr.bf16.gmra.mrb[0].mxu0 %v385
    %v720 = vpop.f32.mrb[0].mxu0
    %v721 = vadd.f32 %v173, %v720
    %v722 = vpop.f32.mrb[0].mxu0
    %v723 = vpop.f32.mrb[0].mxu0
    %v724 = vadd.f32 %v173, %v723
    %v725 = vpop.f32.mrb[0].mxu0
    %726 = vmatprep.mubr.bf16.mxu0 %v549
    %727 = vmatmul.mubr.bf16.gmra.mrb[0].mxu0 %v387
    %v728 = vpop.f32.mrb[0].mxu0
    %v729 = vadd.f32 %v173, %v728
    %v730 = vpop.f32.mrb[0].mxu0
    %v731 = vpop.f32.mrb[0].mxu0
    %v732 = vadd.f32 %v173, %v731
    %v733 = vpop.f32.mrb[0].mxu0
    %734 = vmatprep.mubr.bf16.mxu0 %v552
    %735 = vmatmul.mubr.bf16.gmra.mrb[0].mxu0 %v389
    %v736 = vpop.f32.mrb[0].mxu0
    %v737 = vadd.f32 %v173, %v736
    %v738 = vpop.f32.mrb[0].mxu0
    %v739 = vpop.f32.mrb[0].mxu0
    %v740 = vadd.f32 %v173, %v739
    %v741 = vpop.f32.mrb[0].mxu0
    %742 = vmatprep.mubr.bf16.mxu0 %v555
    %743 = vmatmul.mubr.bf16.gmra.mrb[0].mxu0 %v391
    %v744 = vpop.f32.mrb[0].mxu0
    %v745 = vadd.f32 %v173, %v744
    %v746 = vpop.f32.mrb[0].mxu0
    %v747 = vpop.f32.mrb[0].mxu0
    %v748 = vadd.f32 %v173, %v747
    %v749 = vpop.f32.mrb[0].mxu0
    %750 = vmatprep.mubr.bf16.mxu0 %v558
    %751 = vmatmul.mubr.bf16.gmra.mrb[0].mxu0 %v393
    %v752 = vpop.f32.mrb[0].mxu0
    %v753 = vadd.f32 %v173, %v752
    %v754 = vpop.f32.mrb[0].mxu0
    %v755 = vpop.f32.mrb[0].mxu0
    %v756 = vadd.f32 %v173, %v755
    %v757 = vpop.f32.mrb[0].mxu0
    %758 = vmatprep.mubr.bf16.mxu0 %v561
    %759 = vmatmul.mubr.bf16.gmra.mrb[0].mxu0 %v395
    %v760 = vpop.f32.mrb[0].mxu0
    %v761 = vadd.f32 %v173, %v760
    %v762 = vpop.f32.mrb[0].mxu0
    %v763 = vpop.f32.mrb[0].mxu0
    %v764 = vadd.f32 %v173, %v763
    %v765 = vpop.f32.mrb[0].mxu0
    %766 = vmatprep.mubr.bf16.mxu0 %v564
    %767 = vmatmul.mubr.bf16.gmra.mrb[0].mxu0 %v397
    %v768 = vpop.f32.mrb[0].mxu0
    %v769 = vadd.f32 %v173, %v768
    %v770 = vpop.f32.mrb[0].mxu0
    %v771 = vpop.f32.mrb[0].mxu0
    %v772 = vadd.f32 %v173, %v771
    %v773 = vpop.f32.mrb[0].mxu0
    %774 = vmatprep.mubr.bf16.mxu0 %v567
    %775 = vmatmul.mubr.bf16.gmra.mrb[0].mxu0 %v399
    %v776 = vpop.f32.mrb[0].mxu0
    %v777 = vadd.f32 %v173, %v776
    %v778 = vpop.f32.mrb[0].mxu0
    %v779 = vpop.f32.mrb[0].mxu0
    %v780 = vadd.f32 %v173, %v779
    %v781 = vpop.f32.mrb[0].mxu0
    %782 = vmatprep.mubr.bf16.mxu0 %v570
    %783 = vmatmul.mubr.bf16.gmra.mrb[0].mxu0 %v401
    %v784 = vpop.f32.mrb[0].mxu0
    %v785 = vadd.f32 %v173, %v784
    %v786 = vpop.f32.mrb[0].mxu0
    %v787 = vpop.f32.mrb[0].mxu0
    %v788 = vadd.f32 %v173, %v787
    %v789 = vpop.f32.mrb[0].mxu0
    %790 = vmatprep.mubr.bf16.mxu0 %v573
    %791 = vmatmul.mubr.bf16.gmra.mrb[0].mxu0 %v403
    %v792 = vpop.f32.mrb[0].mxu0
    %v793 = vadd.f32 %v173, %v792
    %v794 = vpop.f32.mrb[0].mxu0
    %v795 = vpop.f32.mrb[0].mxu0
    %v796 = vadd.f32 %v173, %v795
    %v797 = vpop.f32.mrb[0].mxu0
    %798 = vmatprep.mubr.bf16.mxu0 %v576
    %799 = vmatmul.mubr.bf16.gmra.mrb[0].mxu0 %v405
    %v800 = vpop.f32.mrb[0].mxu0
    %v801 = vadd.f32 %v173, %v800
    %v802 = vpop.f32.mrb[0].mxu0
    %v803 = vpop.f32.mrb[0].mxu0
    %v804 = vadd.f32 %v173, %v803
    %v805 = vpop.f32.mrb[0].mxu0
    %806 = vmatprep.mubr.bf16.mxu0 %v579
    %807 = vmatmul.mubr.bf16.gmra.mrb[0].mxu0 %v407
    %v808 = vpop.f32.mrb[0].mxu0
    %v809 = vadd.f32 %v173, %v808
    %v810 = vpop.f32.mrb[0].mxu0
    %v811 = vpop.f32.mrb[0].mxu0
    %v812 = vadd.f32 %v173, %v811
    %v813 = vpop.f32.mrb[0].mxu0
    %814 = vmatprep.mubr.bf16.mxu0 %v582
    %815 = vmatmul.mubr.bf16.gmra.mrb[0].mxu0 %v409
    %v816 = vpop.f32.mrb[0].mxu0
    %v817 = vadd.f32 %v173, %v816
    %v818 = vpop.f32.mrb[0].mxu0
    %v819 = vpop.f32.mrb[0].mxu0
    %v820 = vadd.f32 %v173, %v819
    %v821 = vpop.f32.mrb[0].mxu0
    %822 = vmatprep.mubr.bf16.mxu0 %v585
    %823 = vmatmul.mubr.bf16.gmra.mrb[0].mxu0 %v411
    %v824 = vpop.f32.mrb[0].mxu0
    %v825 = vadd.f32 %v173, %v824
    %v826 = vpop.f32.mrb[0].mxu0
    %v827 = vpop.f32.mrb[0].mxu0
    %v828 = vadd.f32 %v173, %v827
    %v829 = vpop.f32.mrb[0].mxu0
    %830 = vmatprep.mubr.bf16.mxu0 %v588
    %831 = vmatmul.mubr.bf16.gmra.mrb[0].mxu0 %v413
    %v832 = vpop.f32.mrb[0].mxu0
    %v833 = vadd.f32 %v173, %v832
    %v834 = vpop.f32.mrb[0].mxu0
    %v835 = vpop.f32.mrb[0].mxu0
    %v836 = vadd.f32 %v173, %v835
    %v837 = vpop.f32.mrb[0].mxu0
    %838 = vmatprep.mubr.bf16.mxu0 %v591
    %839 = vmatmul.mubr.bf16.gmra.mrb[0].mxu0 %v415
    %v840 = vpop.f32.mrb[0].mxu0
    %v841 = vadd.f32 %v173, %v840
    %v842 = vpop.f32.mrb[0].mxu0
    %v843 = vpop.f32.mrb[0].mxu0
    %v844 = vadd.f32 %v173, %v843
    %v845 = vpop.f32.mrb[0].mxu0
    %846 = vmatprep.mubr.bf16.mxu0 %v594
    %847 = vmatmul.mubr.bf16.gmra.mrb[0].mxu0 %v417
    %v848 = vpop.f32.mrb[0].mxu0
    %v849 = vadd.f32 %v173, %v848
    %v850 = vpop.f32.mrb[0].mxu0
    %v851 = vpop.f32.mrb[0].mxu0
    %v852 = vadd.f32 %v173, %v851
    %v853 = vpop.f32.mrb[0].mxu0
    %854 = vmatprep.mubr.bf16.mxu0 %v597
    %855 = vmatmul.mubr.bf16.gmra.mrb[0].mxu0 %v419
    %v856 = vpop.f32.mrb[0].mxu0
    %v857 = vadd.f32 %v173, %v856
    %v858 = vpop.f32.mrb[0].mxu0
    %v859 = vpop.f32.mrb[0].mxu0
    %v860 = vadd.f32 %v173, %v859
    %v861 = vpop.f32.mrb[0].mxu0
    %862 = vmatprep.mubr.bf16.mxu0 %v600
    %863 = vmatmul.mubr.bf16.gmra.mrb[0].mxu0 %v421
    %v864 = vpop.f32.mrb[0].mxu0
    %v865 = vadd.f32 %v173, %v864
    %v866 = vpop.f32.mrb[0].mxu0
    %v867 = vpop.f32.mrb[0].mxu0
    %v868 = vadd.f32 %v173, %v867
    %v869 = vpop.f32.mrb[0].mxu0
    %870 = vmatprep.mubr.bf16.mxu0 %v603
    %871 = vmatmul.mubr.bf16.gmra.mrb[0].mxu0 %v423
    %v872 = vpop.f32.mrb[0].mxu0
    %v873 = vadd.f32 %v173, %v872
    %v874 = vpop.f32.mrb[0].mxu0
    %v875 = vpop.f32.mrb[0].mxu0
    %v876 = vadd.f32 %v173, %v875
    %v877 = vpop.f32.mrb[0].mxu0
    %878 = vmatprep.mubr.bf16.mxu0 %v606
    %879 = vmatmul.mubr.bf16.gmra.mrb[0].mxu0 %v425
    %v880 = vpop.f32.mrb[0].mxu0
    %v881 = vadd.f32 %v173, %v880
    %v882 = vpop.f32.mrb[0].mxu0
    %v883 = vpop.f32.mrb[0].mxu0
    %v884 = vadd.f32 %v173, %v883
    %v885 = vpop.f32.mrb[0].mxu0
    %886 = vmatprep.mubr.bf16.mxu0 %v609
    %887 = vmatmul.mubr.bf16.gmra.mrb[0].mxu0 %v427
    %v888 = vpop.f32.mrb[0].mxu0
    %v889 = vadd.f32 %v173, %v888
    %v890 = vpop.f32.mrb[0].mxu0
    %v891 = vpop.f32.mrb[0].mxu0
    %v892 = vadd.f32 %v173, %v891
    %v893 = vpop.f32.mrb[0].mxu0
    %894 = vmatprep.mubr.bf16.mxu0 %v612
    %895 = vmatmul.mubr.bf16.gmra.mrb[0].mxu0 %v429
    %v896 = vpop.f32.mrb[0].mxu0
    %v897 = vadd.f32 %v173, %v896
    %v898 = vpop.f32.mrb[0].mxu0
    %v899 = vpop.f32.mrb[0].mxu0
    %v900 = vadd.f32 %v173, %v899
    %v901 = vpop.f32.mrb[0].mxu0
    %902 = vdwg.mxu0
    %v903 = vmax.f32 %v649, 0.0
    %v904 = vmax.f32 %v652, 0.0
    %v905 = vmax.f32 %v657, 0.0
    %v906 = vmax.f32 %v660, 0.0
    %v907 = vmax.f32 %v665, 0.0
    %v908 = vmax.f32 %v668, 0.0
    %v909 = vmax.f32 %v673, 0.0
    %v910 = vmax.f32 %v676, 0.0
    %v911 = vmax.f32 %v681, 0.0
    %v912 = vmax.f32 %v684, 0.0
    %v913 = vmax.f32 %v689, 0.0
    %v914 = vmax.f32 %v692, 0.0
    %v915 = vmax.f32 %v697, 0.0
    %v916 = vmax.f32 %v700, 0.0
    %v917 = vmax.f32 %v705, 0.0
    %v918 = vmax.f32 %v708, 0.0
    %v919 = vmax.f32 %v713, 0.0
    %v920 = vmax.f32 %v716, 0.0
    %v921 = vmax.f32 %v721, 0.0
    %v922 = vmax.f32 %v724, 0.0
    %v923 = vmax.f32 %v729, 0.0
    %v924 = vmax.f32 %v732, 0.0
    %v925 = vmax.f32 %v737, 0.0
    %v926 = vmax.f32 %v740, 0.0
    %v927 = vmax.f32 %v745, 0.0
    %v928 = vmax.f32 %v748, 0.0
    %v929 = vmax.f32 %v753, 0.0
    %v930 = vmax.f32 %v756, 0.0
    %v931 = vmax.f32 %v761, 0.0
    %v932 = vmax.f32 %v764, 0.0
    %v933 = vmax.f32 %v769, 0.0
    %v934 = vmax.f32 %v772, 0.0
    %v935 = vmax.f32 %v777, 0.0
    %v936 = vmax.f32 %v780, 0.0
    %v937 = vmax.f32 %v785, 0.0
    %v938 = vmax.f32 %v788, 0.0
    %v939 = vmax.f32 %v793, 0.0
    %v940 = vmax.f32 %v796, 0.0
    %v941 = vmax.f32 %v801, 0.0
    %v942 = vmax.f32 %v804, 0.0
    %v943 = vmax.f32 %v809, 0.0
    %v944 = vmax.f32 %v812, 0.0
    %v945 = vmax.f32 %v817, 0.0
    %v946 = vmax.f32 %v820, 0.0
    %v947 = vmax.f32 %v825, 0.0
    %v948 = vmax.f32 %v828, 0.0
    %v949 = vmax.f32 %v833, 0.0
    %v950 = vmax.f32 %v836, 0.0
    %v951 = vmax.f32 %v841, 0.0
    %v952 = vmax.f32 %v844, 0.0
    %v953 = vmax.f32 %v849, 0.0
    %v954 = vmax.f32 %v852, 0.0
    %v955 = vmax.f32 %v857, 0.0
    %v956 = vmax.f32 %v860, 0.0
    %v957 = vmax.f32 %v865, 0.0
    %v958 = vmax.f32 %v868, 0.0
    %v959 = vmax.f32 %v873, 0.0
    %v960 = vmax.f32 %v876, 0.0
    %v961 = vmax.f32 %v881, 0.0
    %v962 = vmax.f32 %v884, 0.0
    %v963 = vmax.f32 %v889, 0.0
    %v964 = vmax.f32 %v892, 0.0
    %v965 = vmax.f32 %v897, 0.0
    %v966 = vmax.f32 %v900, 0.0
    %v967 = vpack.c.bf16 %v904, %v903
    %v968 = vpack.c.bf16 %v906, %v905
    %v969 = vpack.c.bf16 %v908, %v907
    %v970 = vpack.c.bf16 %v910, %v909
    %v971 = vpack.c.bf16 %v912, %v911
    %v972 = vpack.c.bf16 %v914, %v913
    %v973 = vpack.c.bf16 %v916, %v915
    %v974 = vpack.c.bf16 %v918, %v917
    %v975 = vpack.c.bf16 %v920, %v919
    %v976 = vpack.c.bf16 %v922, %v921
    %v977 = vpack.c.bf16 %v924, %v923
    %v978 = vpack.c.bf16 %v926, %v925
    %v979 = vpack.c.bf16 %v928, %v927
    %v980 = vpack.c.bf16 %v930, %v929
    %v981 = vpack.c.bf16 %v932, %v931
    %v982 = vpack.c.bf16 %v934, %v933
    %v983 = vpack.c.bf16 %v936, %v935
    %v984 = vpack.c.bf16 %v938, %v937
    %v985 = vpack.c.bf16 %v940, %v939
    %v986 = vpack.c.bf16 %v942, %v941
    %v987 = vpack.c.bf16 %v944, %v943
    %v988 = vpack.c.bf16 %v946, %v945
    %v989 = vpack.c.bf16 %v948, %v947
    %v990 = vpack.c.bf16 %v950, %v949
    %v991 = vpack.c.bf16 %v952, %v951
    %v992 = vpack.c.bf16 %v954, %v953
    %v993 = vpack.c.bf16 %v956, %v955
    %v994 = vpack.c.bf16 %v958, %v957
    %v995 = vpack.c.bf16 %v960, %v959
    %v996 = vpack.c.bf16 %v962, %v961
    %v997 = vpack.c.bf16 %v964, %v963
    %v998 = vpack.c.bf16 %v966, %v965
    %v999 = vld [vmem:[#allocation8] sm:$0xf]
    %v1000 = vld [vmem:[#allocation8 + $0x4] sm:$0xf]
    %v1001 = vld [vmem:[#allocation8 + $0x8] sm:$0xf]
    %v1002 = vld [vmem:[#allocation8 + $0xc] sm:$0xf]
    %v1003 = vld [vmem:[#allocation10] sm:$0x1]
    %v1005 = vlaneseq
    %v1006 = vshrl.u32 %v1005, 7
    %v1007 = vsub.s32 0, %v1006
    %v1008 = vrot.slane %v1003, %v1007
    %v1014 = vunpack.c.l.b16 %v999
    %v1015 = vunpack.c.l.b16 %v1000
    %v1016 = vunpack.c.l.b16 %v1001
    %v1017 = vunpack.c.l.b16 %v1002
    %v1018 = vpack.c.b16 %v1015, %v1014
    %v1019 = vpack.c.b16 %v1017, %v1016
    %vm1022 = vcmask 261120
    %v1024 = vsel %vm1022, %v967, 0
    %v1027 = vsel %vm1022, %v968, 0
    %v1030 = vsel %vm1022, %v969, 0
    %v1033 = vsel %vm1022, %v970, 0
    %v1036 = vsel %vm1022, %v971, 0
    %v1039 = vsel %vm1022, %v972, 0
    %v1042 = vsel %vm1022, %v973, 0
    %v1045 = vsel %vm1022, %v974, 0
    %v1048 = vsel %vm1022, %v975, 0
    %v1051 = vsel %vm1022, %v976, 0
    %v1054 = vsel %vm1022, %v977, 0
    %v1057 = vsel %vm1022, %v978, 0
    %v1060 = vsel %vm1022, %v979, 0
    %v1063 = vsel %vm1022, %v980, 0
    %v1066 = vsel %vm1022, %v981, 0
    %v1069 = vsel %vm1022, %v982, 0
    %v1072 = vsel %vm1022, %v983, 0
    %v1075 = vsel %vm1022, %v984, 0
    %v1078 = vsel %vm1022, %v985, 0
    %v1081 = vsel %vm1022, %v986, 0
    %v1084 = vsel %vm1022, %v987, 0
    %v1087 = vsel %vm1022, %v988, 0
    %v1090 = vsel %vm1022, %v989, 0
    %v1093 = vsel %vm1022, %v990, 0
    %v1096 = vsel %vm1022, %v991, 0
    %v1099 = vsel %vm1022, %v992, 0
    %v1102 = vsel %vm1022, %v993, 0
    %v1105 = vsel %vm1022, %v994, 0
    %v1108 = vsel %vm1022, %v995, 0
    %v1111 = vsel %vm1022, %v996, 0
    %v1114 = vsel %vm1022, %v997, 0
    %v1117 = vsel %vm1022, %v998, 0
    %1119 = vmatprep.subr.bf16.mxu0 0
    %1120 = vmatpush1.bf16.msra.mxu0 %v1018
    %1121 = vmatprep.subr.bf16.mxu0 0
    %1122 = vmatpush1.bf16.msra.mxu0 %v1019
    %1123 = vmatprep.subr.bf16.mxu0 0
    %1124 = vmatpush1.bf16.msra.mxu0 0
    %1125 = vmatprep.subr.bf16.mxu0 0
    %1126 = vmatpush1.bf16.msra.mxu0 0
    %1127 = vmatprep.subr.bf16.mxu0 0
    %1128 = vmatpush1.bf16.msra.mxu0 0
    %1129 = vmatprep.subr.bf16.mxu0 0
    %1130 = vmatpush1.bf16.msra.mxu0 0
    %1131 = vmatprep.subr.bf16.mxu0 0
    %1132 = vmatpush1.bf16.msra.mxu0 0
    %1133 = vmatprep.subr.bf16.mxu0 0
    %1134 = vmatpush1.bf16.msra.mxu0 0
    %1135 = vmatprep.subr.bf16.mxu0 0
    %1136 = vmatpush1.bf16.msra.mxu0 0
    %1137 = vmatprep.subr.bf16.mxu0 0
    %1138 = vmatpush1.bf16.msra.mxu0 0
    %1139 = vmatprep.subr.bf16.mxu0 0
    %1140 = vmatpush1.bf16.msra.mxu0 0
    %1141 = vmatprep.subr.bf16.mxu0 0
    %1142 = vmatpush1.bf16.msra.mxu0 0
    %1143 = vmatprep.subr.bf16.mxu0 0
    %1144 = vmatpush1.bf16.msra.mxu0 0
    %1145 = vmatprep.subr.bf16.mxu0 0
    %1146 = vmatpush1.bf16.msra.mxu0 0
    %1147 = vmatprep.subr.bf16.mxu0 0
    %1148 = vmatpush1.bf16.msra.mxu0 0
    %1149 = vmatprep.subr.bf16.mxu0 0
    %1150 = vmatpush1.bf16.msra.mxu0 0
    %1151 = vmatprep.mubr.bf16.mxu0 0
    %1152 = vmatmul.mubr.bf16.gmra.mrb[0].mxu0 %v1024
    %v1153 = vpop.f32.mrb[0].mxu0
    %v1154 = vadd.f32 %v1008, %v1153
    %v1155 = vpop.f32.mrb[0].mxu0
    %v1156 = vpop.f32.mrb[0].mxu0
    %v1157 = vadd.f32 %v1008, %v1156
    %v1158 = vpop.f32.mrb[0].mxu0
    %1159 = vmatprep.mubr.bf16.mxu0 0
    %1160 = vmatmul.mubr.bf16.gmra.mrb[0].mxu0 %v1027
    %v1161 = vpop.f32.mrb[0].mxu0
    %v1162 = vadd.f32 %v1008, %v1161
    %v1163 = vpop.f32.mrb[0].mxu0
    %v1164 = vpop.f32.mrb[0].mxu0
    %v1165 = vadd.f32 %v1008, %v1164
    %v1166 = vpop.f32.mrb[0].mxu0
    %1167 = vmatprep.mubr.bf16.mxu0 0
    %1168 = vmatmul.mubr.bf16.gmra.mrb[0].mxu0 %v1030
    %v1169 = vpop.f32.mrb[0].mxu0
    %v1170 = vadd.f32 %v1008, %v1169
    %v1171 = vpop.f32.mrb[0].mxu0
    %v1172 = vpop.f32.mrb[0].mxu0
    %v1173 = vadd.f32 %v1008, %v1172
    %v1174 = vpop.f32.mrb[0].mxu0
    %1175 = vmatprep.mubr.bf16.mxu0 0
    %1176 = vmatmul.mubr.bf16.gmra.mrb[0].mxu0 %v1033
    %v1177 = vpop.f32.mrb[0].mxu0
    %v1178 = vadd.f32 %v1008, %v1177
    %v1179 = vpop.f32.mrb[0].mxu0
    %v1180 = vpop.f32.mrb[0].mxu0
    %v1181 = vadd.f32 %v1008, %v1180
    %v1182 = vpop.f32.mrb[0].mxu0
    %1183 = vmatprep.mubr.bf16.mxu0 0
    %1184 = vmatmul.mubr.bf16.gmra.mrb[0].mxu0 %v1036
    %v1185 = vpop.f32.mrb[0].mxu0
    %v1186 = vadd.f32 %v1008, %v1185
    %v1187 = vpop.f32.mrb[0].mxu0
    %v1188 = vpop.f32.mrb[0].mxu0
    %v1189 = vadd.f32 %v1008, %v1188
    %v1190 = vpop.f32.mrb[0].mxu0
    %1191 = vmatprep.mubr.bf16.mxu0 0
    %1192 = vmatmul.mubr.bf16.gmra.mrb[0].mxu0 %v1039
    %v1193 = vpop.f32.mrb[0].mxu0
    %v1194 = vadd.f32 %v1008, %v1193
    %v1195 = vpop.f32.mrb[0].mxu0
    %v1196 = vpop.f32.mrb[0].mxu0
    %v1197 = vadd.f32 %v1008, %v1196
    %v1198 = vpop.f32.mrb[0].mxu0
    %1199 = vmatprep.mubr.bf16.mxu0 0
    %1200 = vmatmul.mubr.bf16.gmra.mrb[0].mxu0 %v1042
    %v1201 = vpop.f32.mrb[0].mxu0
    %v1202 = vadd.f32 %v1008, %v1201
    %v1203 = vpop.f32.mrb[0].mxu0
    %v1204 = vpop.f32.mrb[0].mxu0
    %v1205 = vadd.f32 %v1008, %v1204
    %v1206 = vpop.f32.mrb[0].mxu0
    %1207 = vmatprep.mubr.bf16.mxu0 0
    %1208 = vmatmul.mubr.bf16.gmra.mrb[0].mxu0 %v1045
    %v1209 = vpop.f32.mrb[0].mxu0
    %v1210 = vadd.f32 %v1008, %v1209
    %v1211 = vpop.f32.mrb[0].mxu0
    %v1212 = vpop.f32.mrb[0].mxu0
    %v1213 = vadd.f32 %v1008, %v1212
    %v1214 = vpop.f32.mrb[0].mxu0
    %1215 = vmatprep.mubr.bf16.mxu0 0
    %1216 = vmatmul.mubr.bf16.gmra.mrb[0].mxu0 %v1048
    %v1217 = vpop.f32.mrb[0].mxu0
    %v1218 = vadd.f32 %v1008, %v1217
    %v1219 = vpop.f32.mrb[0].mxu0
    %v1220 = vpop.f32.mrb[0].mxu0
    %v1221 = vadd.f32 %v1008, %v1220
    %v1222 = vpop.f32.mrb[0].mxu0
    %1223 = vmatprep.mubr.bf16.mxu0 0
    %1224 = vmatmul.mubr.bf16.gmra.mrb[0].mxu0 %v1051
    %v1225 = vpop.f32.mrb[0].mxu0
    %v1226 = vadd.f32 %v1008, %v1225
    %v1227 = vpop.f32.mrb[0].mxu0
    %v1228 = vpop.f32.mrb[0].mxu0
    %v1229 = vadd.f32 %v1008, %v1228
    %v1230 = vpop.f32.mrb[0].mxu0
    %1231 = vmatprep.mubr.bf16.mxu0 0
    %1232 = vmatmul.mubr.bf16.gmra.mrb[0].mxu0 %v1054
    %v1233 = vpop.f32.mrb[0].mxu0
    %v1234 = vadd.f32 %v1008, %v1233
    %v1235 = vpop.f32.mrb[0].mxu0
    %v1236 = vpop.f32.mrb[0].mxu0
    %v1237 = vadd.f32 %v1008, %v1236
    %v1238 = vpop.f32.mrb[0].mxu0
    %1239 = vmatprep.mubr.bf16.mxu0 0
    %1240 = vmatmul.mubr.bf16.gmra.mrb[0].mxu0 %v1057
    %v1241 = vpop.f32.mrb[0].mxu0
    %v1242 = vadd.f32 %v1008, %v1241
    %v1243 = vpop.f32.mrb[0].mxu0
    %v1244 = vpop.f32.mrb[0].mxu0
    %v1245 = vadd.f32 %v1008, %v1244
    %v1246 = vpop.f32.mrb[0].mxu0
    %1247 = vmatprep.mubr.bf16.mxu0 0
    %1248 = vmatmul.mubr.bf16.gmra.mrb[0].mxu0 %v1060
    %v1249 = vpop.f32.mrb[0].mxu0
    %v1250 = vadd.f32 %v1008, %v1249
    %v1251 = vpop.f32.mrb[0].mxu0
    %v1252 = vpop.f32.mrb[0].mxu0
    %v1253 = vadd.f32 %v1008, %v1252
    %v1254 = vpop.f32.mrb[0].mxu0
    %1255 = vmatprep.mubr.bf16.mxu0 0
    %1256 = vmatmul.mubr.bf16.gmra.mrb[0].mxu0 %v1063
    %v1257 = vpop.f32.mrb[0].mxu0
    %v1258 = vadd.f32 %v1008, %v1257
    %v1259 = vpop.f32.mrb[0].mxu0
    %v1260 = vpop.f32.mrb[0].mxu0
    %v1261 = vadd.f32 %v1008, %v1260
    %v1262 = vpop.f32.mrb[0].mxu0
    %1263 = vmatprep.mubr.bf16.mxu0 0
    %1264 = vmatmul.mubr.bf16.gmra.mrb[0].mxu0 %v1066
    %v1265 = vpop.f32.mrb[0].mxu0
    %v1266 = vadd.f32 %v1008, %v1265
    %v1267 = vpop.f32.mrb[0].mxu0
    %v1268 = vpop.f32.mrb[0].mxu0
    %v1269 = vadd.f32 %v1008, %v1268
    %v1270 = vpop.f32.mrb[0].mxu0
    %1271 = vmatprep.mubr.bf16.mxu0 0
    %1272 = vmatmul.mubr.bf16.gmra.mrb[0].mxu0 %v1069
    %v1273 = vpop.f32.mrb[0].mxu0
    %v1274 = vadd.f32 %v1008, %v1273
    %v1275 = vpop.f32.mrb[0].mxu0
    %v1276 = vpop.f32.mrb[0].mxu0
    %v1277 = vadd.f32 %v1008, %v1276
    %v1278 = vpop.f32.mrb[0].mxu0
    %1279 = vmatprep.mubr.bf16.mxu0 0
    %1280 = vmatmul.mubr.bf16.gmra.mrb[0].mxu0 %v1072
    %v1281 = vpop.f32.mrb[0].mxu0
    %v1282 = vadd.f32 %v1008, %v1281
    %v1283 = vpop.f32.mrb[0].mxu0
    %v1284 = vpop.f32.mrb[0].mxu0
    %v1285 = vadd.f32 %v1008, %v1284
    %v1286 = vpop.f32.mrb[0].mxu0
    %1287 = vmatprep.mubr.bf16.mxu0 0
    %1288 = vmatmul.mubr.bf16.gmra.mrb[0].mxu0 %v1075
    %v1289 = vpop.f32.mrb[0].mxu0
    %v1290 = vadd.f32 %v1008, %v1289
    %v1291 = vpop.f32.mrb[0].mxu0
    %v1292 = vpop.f32.mrb[0].mxu0
    %v1293 = vadd.f32 %v1008, %v1292
    %v1294 = vpop.f32.mrb[0].mxu0
    %1295 = vmatprep.mubr.bf16.mxu0 0
    %1296 = vmatmul.mubr.bf16.gmra.mrb[0].mxu0 %v1078
    %v1297 = vpop.f32.mrb[0].mxu0
    %v1298 = vadd.f32 %v1008, %v1297
    %v1299 = vpop.f32.mrb[0].mxu0
    %v1300 = vpop.f32.mrb[0].mxu0
    %v1301 = vadd.f32 %v1008, %v1300
    %v1302 = vpop.f32.mrb[0].mxu0
    %1303 = vmatprep.mubr.bf16.mxu0 0
    %1304 = vmatmul.mubr.bf16.gmra.mrb[0].mxu0 %v1081
    %v1305 = vpop.f32.mrb[0].mxu0
    %v1306 = vadd.f32 %v1008, %v1305
    %v1307 = vpop.f32.mrb[0].mxu0
    %v1308 = vpop.f32.mrb[0].mxu0
    %v1309 = vadd.f32 %v1008, %v1308
    %v1310 = vpop.f32.mrb[0].mxu0
    %1311 = vmatprep.mubr.bf16.mxu0 0
    %1312 = vmatmul.mubr.bf16.gmra.mrb[0].mxu0 %v1084
    %v1313 = vpop.f32.mrb[0].mxu0
    %v1314 = vadd.f32 %v1008, %v1313
    %v1315 = vpop.f32.mrb[0].mxu0
    %v1316 = vpop.f32.mrb[0].mxu0
    %v1317 = vadd.f32 %v1008, %v1316
    %v1318 = vpop.f32.mrb[0].mxu0
    %1319 = vmatprep.mubr.bf16.mxu0 0
    %1320 = vmatmul.mubr.bf16.gmra.mrb[0].mxu0 %v1087
    %v1321 = vpop.f32.mrb[0].mxu0
    %v1322 = vadd.f32 %v1008, %v1321
    %v1323 = vpop.f32.mrb[0].mxu0
    %v1324 = vpop.f32.mrb[0].mxu0
    %v1325 = vadd.f32 %v1008, %v1324
    %v1326 = vpop.f32.mrb[0].mxu0
    %1327 = vmatprep.mubr.bf16.mxu0 0
    %1328 = vmatmul.mubr.bf16.gmra.mrb[0].mxu0 %v1090
    %v1329 = vpop.f32.mrb[0].mxu0
    %v1330 = vadd.f32 %v1008, %v1329
    %v1331 = vpop.f32.mrb[0].mxu0
    %v1332 = vpop.f32.mrb[0].mxu0
    %v1333 = vadd.f32 %v1008, %v1332
    %v1334 = vpop.f32.mrb[0].mxu0
    %1335 = vmatprep.mubr.bf16.mxu0 0
    %1336 = vmatmul.mubr.bf16.gmra.mrb[0].mxu0 %v1093
    %v1337 = vpop.f32.mrb[0].mxu0
    %v1338 = vadd.f32 %v1008, %v1337
    %v1339 = vpop.f32.mrb[0].mxu0
    %v1340 = vpop.f32.mrb[0].mxu0
    %v1341 = vadd.f32 %v1008, %v1340
    %v1342 = vpop.f32.mrb[0].mxu0
    %1343 = vmatprep.mubr.bf16.mxu0 0
    %1344 = vmatmul.mubr.bf16.gmra.mrb[0].mxu0 %v1096
    %v1345 = vpop.f32.mrb[0].mxu0
    %v1346 = vadd.f32 %v1008, %v1345
    %v1347 = vpop.f32.mrb[0].mxu0
    %v1348 = vpop.f32.mrb[0].mxu0
    %v1349 = vadd.f32 %v1008, %v1348
    %v1350 = vpop.f32.mrb[0].mxu0
    %1351 = vmatprep.mubr.bf16.mxu0 0
    %1352 = vmatmul.mubr.bf16.gmra.mrb[0].mxu0 %v1099
    %v1353 = vpop.f32.mrb[0].mxu0
    %v1354 = vadd.f32 %v1008, %v1353
    %v1355 = vpop.f32.mrb[0].mxu0
    %v1356 = vpop.f32.mrb[0].mxu0
    %v1357 = vadd.f32 %v1008, %v1356
    %v1358 = vpop.f32.mrb[0].mxu0
    %1359 = vmatprep.mubr.bf16.mxu0 0
    %1360 = vmatmul.mubr.bf16.gmra.mrb[0].mxu0 %v1102
    %v1361 = vpop.f32.mrb[0].mxu0
    %v1362 = vadd.f32 %v1008, %v1361
    %v1363 = vpop.f32.mrb[0].mxu0
    %v1364 = vpop.f32.mrb[0].mxu0
    %v1365 = vadd.f32 %v1008, %v1364
    %v1366 = vpop.f32.mrb[0].mxu0
    %1367 = vmatprep.mubr.bf16.mxu0 0
    %1368 = vmatmul.mubr.bf16.gmra.mrb[0].mxu0 %v1105
    %v1369 = vpop.f32.mrb[0].mxu0
    %v1370 = vadd.f32 %v1008, %v1369
    %v1371 = vpop.f32.mrb[0].mxu0
    %v1372 = vpop.f32.mrb[0].mxu0
    %v1373 = vadd.f32 %v1008, %v1372
    %v1374 = vpop.f32.mrb[0].mxu0
    %1375 = vmatprep.mubr.bf16.mxu0 0
    %1376 = vmatmul.mubr.bf16.gmra.mrb[0].mxu0 %v1108
    %v1377 = vpop.f32.mrb[0].mxu0
    %v1378 = vadd.f32 %v1008, %v1377
    %v1379 = vpop.f32.mrb[0].mxu0
    %v1380 = vpop.f32.mrb[0].mxu0
    %v1381 = vadd.f32 %v1008, %v1380
    %v1382 = vpop.f32.mrb[0].mxu0
    %1383 = vmatprep.mubr.bf16.mxu0 0
    %1384 = vmatmul.mubr.bf16.gmra.mrb[0].mxu0 %v1111
    %v1385 = vpop.f32.mrb[0].mxu0
    %v1386 = vadd.f32 %v1008, %v1385
    %v1387 = vpop.f32.mrb[0].mxu0
    %v1388 = vpop.f32.mrb[0].mxu0
    %v1389 = vadd.f32 %v1008, %v1388
    %v1390 = vpop.f32.mrb[0].mxu0
    %1391 = vmatprep.mubr.bf16.mxu0 0
    %1392 = vmatmul.mubr.bf16.gmra.mrb[0].mxu0 %v1114
    %v1393 = vpop.f32.mrb[0].mxu0
    %v1394 = vadd.f32 %v1008, %v1393
    %v1395 = vpop.f32.mrb[0].mxu0
    %v1396 = vpop.f32.mrb[0].mxu0
    %v1397 = vadd.f32 %v1008, %v1396
    %v1398 = vpop.f32.mrb[0].mxu0
    %1399 = vmatprep.mubr.bf16.mxu0 0
    %1400 = vmatmul.mubr.bf16.gmra.mrb[0].mxu0 %v1117
    %v1401 = vpop.f32.mrb[0].mxu0
    %v1402 = vadd.f32 %v1008, %v1401
    %v1403 = vpop.f32.mrb[0].mxu0
    %v1404 = vpop.f32.mrb[0].mxu0
    %v1405 = vadd.f32 %v1008, %v1404
    %v1406 = vpop.f32.mrb[0].mxu0
    %1407 = vdwg.mxu0
    %1472 = vrot.lane.b32.xlu0 %v1154, 119
    %v1473 = vpop.permute.xlu0 %1472
    %1474 = vrot.lane.b32.xlu0 %v1157, 119
    %v1475 = vpop.permute.xlu0 %1474
    %1476 = vrot.lane.b32.xlu0 %v1162, 119
    %v1477 = vpop.permute.xlu0 %1476
    %1478 = vrot.lane.b32.xlu0 %v1165, 119
    %v1479 = vpop.permute.xlu0 %1478
    %1480 = vrot.lane.b32.xlu0 %v1170, 119
    %v1481 = vpop.permute.xlu0 %1480
    %1482 = vrot.lane.b32.xlu0 %v1173, 119
    %v1483 = vpop.permute.xlu0 %1482
    %1484 = vrot.lane.b32.xlu0 %v1178, 119
    %v1485 = vpop.permute.xlu0 %1484
    %1486 = vrot.lane.b32.xlu0 %v1181, 119
    %v1487 = vpop.permute.xlu0 %1486
    %1488 = vrot.lane.b32.xlu0 %v1186, 119
    %v1489 = vpop.permute.xlu0 %1488
    %1490 = vrot.lane.b32.xlu0 %v1189, 119
    %v1491 = vpop.permute.xlu0 %1490
    %1492 = vrot.lane.b32.xlu0 %v1194, 119
    %v1493 = vpop.permute.xlu0 %1492
    %1494 = vrot.lane.b32.xlu0 %v1197, 119
    %v1495 = vpop.permute.xlu0 %1494
    %1496 = vrot.lane.b32.xlu0 %v1202, 119
    %v1497 = vpop.permute.xlu0 %1496
    %1498 = vrot.lane.b32.xlu0 %v1205, 119
    %v1499 = vpop.permute.xlu0 %1498
    %1500 = vrot.lane.b32.xlu0 %v1210, 119
    %v1501 = vpop.permute.xlu0 %1500
    %1502 = vrot.lane.b32.xlu0 %v1213, 119
    %v1503 = vpop.permute.xlu0 %1502
    %1504 = vrot.lane.b32.xlu0 %v1218, 119
    %v1505 = vpop.permute.xlu0 %1504
    %1506 = vrot.lane.b32.xlu0 %v1221, 119
    %v1507 = vpop.permute.xlu0 %1506
    %1508 = vrot.lane.b32.xlu0 %v1226, 119
    %v1509 = vpop.permute.xlu0 %1508
    %1510 = vrot.lane.b32.xlu0 %v1229, 119
    %v1511 = vpop.permute.xlu0 %1510
    %1512 = vrot.lane.b32.xlu0 %v1234, 119
    %v1513 = vpop.permute.xlu0 %1512
    %1514 = vrot.lane.b32.xlu0 %v1237, 119
    %v1515 = vpop.permute.xlu0 %1514
    %1516 = vrot.lane.b32.xlu0 %v1242, 119
    %v1517 = vpop.permute.xlu0 %1516
    %1518 = vrot.lane.b32.xlu0 %v1245, 119
    %v1519 = vpop.permute.xlu0 %1518
    %1520 = vrot.lane.b32.xlu0 %v1250, 119
    %v1521 = vpop.permute.xlu0 %1520
    %1522 = vrot.lane.b32.xlu0 %v1253, 119
    %v1523 = vpop.permute.xlu0 %1522
    %1524 = vrot.lane.b32.xlu0 %v1258, 119
    %v1525 = vpop.permute.xlu0 %1524
    %1526 = vrot.lane.b32.xlu0 %v1261, 119
    %v1527 = vpop.permute.xlu0 %1526
    %1528 = vrot.lane.b32.xlu0 %v1266, 119
    %v1529 = vpop.permute.xlu0 %1528
    %1530 = vrot.lane.b32.xlu0 %v1269, 119
    %v1531 = vpop.permute.xlu0 %1530
    %1532 = vrot.lane.b32.xlu0 %v1274, 119
    %v1533 = vpop.permute.xlu0 %1532
    %1534 = vrot.lane.b32.xlu0 %v1277, 119
    %v1535 = vpop.permute.xlu0 %1534
    %1536 = vrot.lane.b32.xlu0 %v1282, 119
    %v1537 = vpop.permute.xlu0 %1536
    %1538 = vrot.lane.b32.xlu0 %v1285, 119
    %v1539 = vpop.permute.xlu0 %1538
    %1540 = vrot.lane.b32.xlu0 %v1290, 119
    %v1541 = vpop.permute.xlu0 %1540
    %1542 = vrot.lane.b32.xlu0 %v1293, 119
    %v1543 = vpop.permute.xlu0 %1542
    %1544 = vrot.lane.b32.xlu0 %v1298, 119
    %v1545 = vpop.permute.xlu0 %1544
    %1546 = vrot.lane.b32.xlu0 %v1301, 119
    %v1547 = vpop.permute.xlu0 %1546
    %1548 = vrot.lane.b32.xlu0 %v1306, 119
    %v1549 = vpop.permute.xlu0 %1548
    %1550 = vrot.lane.b32.xlu0 %v1309, 119
    %v1551 = vpop.permute.xlu0 %1550
    %1552 = vrot.lane.b32.xlu0 %v1314, 119
    %v1553 = vpop.permute.xlu0 %1552
    %1554 = vrot.lane.b32.xlu0 %v1317, 119
    %v1555 = vpop.permute.xlu0 %1554
    %1556 = vrot.lane.b32.xlu0 %v1322, 119
    %v1557 = vpop.permute.xlu0 %1556
    %1558 = vrot.lane.b32.xlu0 %v1325, 119
    %v1559 = vpop.permute.xlu0 %1558
    %1560 = vrot.lane.b32.xlu0 %v1330, 119
    %v1561 = vpop.permute.xlu0 %1560
    %1562 = vrot.lane.b32.xlu0 %v1333, 119
    %v1563 = vpop.permute.xlu0 %1562
    %1564 = vrot.lane.b32.xlu0 %v1338, 119
    %v1565 = vpop.permute.xlu0 %1564
    %1566 = vrot.lane.b32.xlu0 %v1341, 119
    %v1567 = vpop.permute.xlu0 %1566
    %1568 = vrot.lane.b32.xlu0 %v1346, 119
    %v1569 = vpop.permute.xlu0 %1568
    %1570 = vrot.lane.b32.xlu0 %v1349, 119
    %v1571 = vpop.permute.xlu0 %1570
    %1572 = vrot.lane.b32.xlu0 %v1354, 119
    %v1573 = vpop.permute.xlu0 %1572
    %1574 = vrot.lane.b32.xlu0 %v1357, 119
    %v1575 = vpop.permute.xlu0 %1574
    %1576 = vrot.lane.b32.xlu0 %v1362, 119
    %v1577 = vpop.permute.xlu0 %1576
    %1578 = vrot.lane.b32.xlu0 %v1365, 119
    %v1579 = vpop.permute.xlu0 %1578
    %1580 = vrot.lane.b32.xlu0 %v1370, 119
    %v1581 = vpop.permute.xlu0 %1580
    %1582 = vrot.lane.b32.xlu0 %v1373, 119
    %v1583 = vpop.permute.xlu0 %1582
    %1584 = vrot.lane.b32.xlu0 %v1378, 119
    %v1585 = vpop.permute.xlu0 %1584
    %1586 = vrot.lane.b32.xlu0 %v1381, 119
    %v1587 = vpop.permute.xlu0 %1586
    %1588 = vrot.lane.b32.xlu0 %v1386, 119
    %v1589 = vpop.permute.xlu0 %1588
    %1590 = vrot.lane.b32.xlu0 %v1389, 119
    %v1591 = vpop.permute.xlu0 %1590
    %1592 = vrot.lane.b32.xlu0 %v1394, 119
    %v1593 = vpop.permute.xlu0 %1592
    %1594 = vrot.lane.b32.xlu0 %v1397, 119
    %v1595 = vpop.permute.xlu0 %1594
    %1596 = vrot.lane.b32.xlu0 %v1402, 119
    %v1597 = vpop.permute.xlu0 %1596
    %1598 = vrot.lane.b32.xlu0 %v1405, 119
    %v1599 = vpop.permute.xlu0 %1598
    %v1664 = vsub.f32 %v1154, %v1473
    %v1665 = vsub.f32 %v1157, %v1475
    %v1666 = vsub.f32 %v1162, %v1477
    %v1667 = vsub.f32 %v1165, %v1479
    %v1668 = vsub.f32 %v1170, %v1481
    %v1669 = vsub.f32 %v1173, %v1483
    %v1670 = vsub.f32 %v1178, %v1485
    %v1671 = vsub.f32 %v1181, %v1487
    %v1672 = vsub.f32 %v1186, %v1489
    %v1673 = vsub.f32 %v1189, %v1491
    %v1674 = vsub.f32 %v1194, %v1493
    %v1675 = vsub.f32 %v1197, %v1495
    %v1676 = vsub.f32 %v1202, %v1497
    %v1677 = vsub.f32 %v1205, %v1499
    %v1678 = vsub.f32 %v1210, %v1501
    %v1679 = vsub.f32 %v1213, %v1503
    %v1680 = vsub.f32 %v1218, %v1505
    %v1681 = vsub.f32 %v1221, %v1507
    %v1682 = vsub.f32 %v1226, %v1509
    %v1683 = vsub.f32 %v1229, %v1511
    %v1684 = vsub.f32 %v1234, %v1513
    %v1685 = vsub.f32 %v1237, %v1515
    %v1686 = vsub.f32 %v1242, %v1517
    %v1687 = vsub.f32 %v1245, %v1519
    %v1688 = vsub.f32 %v1250, %v1521
    %v1689 = vsub.f32 %v1253, %v1523
    %v1690 = vsub.f32 %v1258, %v1525
    %v1691 = vsub.f32 %v1261, %v1527
    %v1692 = vsub.f32 %v1266, %v1529
    %v1693 = vsub.f32 %v1269, %v1531
    %v1694 = vsub.f32 %v1274, %v1533
    %v1695 = vsub.f32 %v1277, %v1535
    %v1696 = vsub.f32 %v1282, %v1537
    %v1697 = vsub.f32 %v1285, %v1539
    %v1698 = vsub.f32 %v1290, %v1541
    %v1699 = vsub.f32 %v1293, %v1543
    %v1700 = vsub.f32 %v1298, %v1545
    %v1701 = vsub.f32 %v1301, %v1547
    %v1702 = vsub.f32 %v1306, %v1549
    %v1703 = vsub.f32 %v1309, %v1551
    %v1704 = vsub.f32 %v1314, %v1553
    %v1705 = vsub.f32 %v1317, %v1555
    %v1706 = vsub.f32 %v1322, %v1557
    %v1707 = vsub.f32 %v1325, %v1559
    %v1708 = vsub.f32 %v1330, %v1561
    %v1709 = vsub.f32 %v1333, %v1563
    %v1710 = vsub.f32 %v1338, %v1565
    %v1711 = vsub.f32 %v1341, %v1567
    %v1712 = vsub.f32 %v1346, %v1569
    %v1713 = vsub.f32 %v1349, %v1571
    %v1714 = vsub.f32 %v1354, %v1573
    %v1715 = vsub.f32 %v1357, %v1575
    %v1716 = vsub.f32 %v1362, %v1577
    %v1717 = vsub.f32 %v1365, %v1579
    %v1718 = vsub.f32 %v1370, %v1581
    %v1719 = vsub.f32 %v1373, %v1583
    %v1720 = vsub.f32 %v1378, %v1585
    %v1721 = vsub.f32 %v1381, %v1587
    %v1722 = vsub.f32 %v1386, %v1589
    %v1723 = vsub.f32 %v1389, %v1591
    %v1724 = vsub.f32 %v1394, %v1593
    %v1725 = vsub.f32 %v1397, %v1595
    %v1726 = vsub.f32 %v1402, %v1597
    %v1727 = vsub.f32 %v1405, %v1599
    %v1728 = vmul.f32 %v1664, 1.442695
    %v1729 = vpow.pop %v1728
    %v1730 = vmul.f32 %v1665, 1.442695
    %v1731 = vpow.pop %v1730
    %v1732 = vmul.f32 %v1666, 1.442695
    %v1733 = vpow.pop %v1732
    %v1734 = vmul.f32 %v1667, 1.442695
    %v1735 = vpow.pop %v1734
    %v1736 = vmul.f32 %v1668, 1.442695
    %v1737 = vpow.pop %v1736
    %v1738 = vmul.f32 %v1669, 1.442695
    %v1739 = vpow.pop %v1738
    %v1740 = vmul.f32 %v1670, 1.442695
    %v1741 = vpow.pop %v1740
    %v1742 = vmul.f32 %v1671, 1.442695
    %v1743 = vpow.pop %v1742
    %v1744 = vmul.f32 %v1672, 1.442695
    %v1745 = vpow.pop %v1744
    %v1746 = vmul.f32 %v1673, 1.442695
    %v1747 = vpow.pop %v1746
    %v1748 = vmul.f32 %v1674, 1.442695
    %v1749 = vpow.pop %v1748
    %v1750 = vmul.f32 %v1675, 1.442695
    %v1751 = vpow.pop %v1750
    %v1752 = vmul.f32 %v1676, 1.442695
    %v1753 = vpow.pop %v1752
    %v1754 = vmul.f32 %v1677, 1.442695
    %v1755 = vpow.pop %v1754
    %v1756 = vmul.f32 %v1678, 1.442695
    %v1757 = vpow.pop %v1756
    %v1758 = vmul.f32 %v1679, 1.442695
    %v1759 = vpow.pop %v1758
    %v1760 = vmul.f32 %v1680, 1.442695
    %v1761 = vpow.pop %v1760
    %v1762 = vmul.f32 %v1681, 1.442695
    %v1763 = vpow.pop %v1762
    %v1764 = vmul.f32 %v1682, 1.442695
    %v1765 = vpow.pop %v1764
    %v1766 = vmul.f32 %v1683, 1.442695
    %v1767 = vpow.pop %v1766
    %v1768 = vmul.f32 %v1684, 1.442695
    %v1769 = vpow.pop %v1768
    %v1770 = vmul.f32 %v1685, 1.442695
    %v1771 = vpow.pop %v1770
    %v1772 = vmul.f32 %v1686, 1.442695
    %v1773 = vpow.pop %v1772
    %v1774 = vmul.f32 %v1687, 1.442695
    %v1775 = vpow.pop %v1774
    %v1776 = vmul.f32 %v1688, 1.442695
    %v1777 = vpow.pop %v1776
    %v1778 = vmul.f32 %v1689, 1.442695
    %v1779 = vpow.pop %v1778
    %v1780 = vmul.f32 %v1690, 1.442695
    %v1781 = vpow.pop %v1780
    %v1782 = vmul.f32 %v1691, 1.442695
    %v1783 = vpow.pop %v1782
    %v1784 = vmul.f32 %v1692, 1.442695
    %v1785 = vpow.pop %v1784
    %v1786 = vmul.f32 %v1693, 1.442695
    %v1787 = vpow.pop %v1786
    %v1788 = vmul.f32 %v1694, 1.442695
    %v1789 = vpow.pop %v1788
    %v1790 = vmul.f32 %v1695, 1.442695
    %v1791 = vpow.pop %v1790
    %v1792 = vmul.f32 %v1696, 1.442695
    %v1793 = vpow.pop %v1792
    %v1794 = vmul.f32 %v1697, 1.442695
    %v1795 = vpow.pop %v1794
    %v1796 = vmul.f32 %v1698, 1.442695
    %v1797 = vpow.pop %v1796
    %v1798 = vmul.f32 %v1699, 1.442695
    %v1799 = vpow.pop %v1798
    %v1800 = vmul.f32 %v1700, 1.442695
    %v1801 = vpow.pop %v1800
    %v1802 = vmul.f32 %v1701, 1.442695
    %v1803 = vpow.pop %v1802
    %v1804 = vmul.f32 %v1702, 1.442695
    %v1805 = vpow.pop %v1804
    %v1806 = vmul.f32 %v1703, 1.442695
    %v1807 = vpow.pop %v1806
    %v1808 = vmul.f32 %v1704, 1.442695
    %v1809 = vpow.pop %v1808
    %v1810 = vmul.f32 %v1705, 1.442695
    %v1811 = vpow.pop %v1810
    %v1812 = vmul.f32 %v1706, 1.442695
    %v1813 = vpow.pop %v1812
    %v1814 = vmul.f32 %v1707, 1.442695
    %v1815 = vpow.pop %v1814
    %v1816 = vmul.f32 %v1708, 1.442695
    %v1817 = vpow.pop %v1816
    %v1818 = vmul.f32 %v1709, 1.442695
    %v1819 = vpow.pop %v1818
    %v1820 = vmul.f32 %v1710, 1.442695
    %v1821 = vpow.pop %v1820
    %v1822 = vmul.f32 %v1711, 1.442695
    %v1823 = vpow.pop %v1822
    %v1824 = vmul.f32 %v1712, 1.442695
    %v1825 = vpow.pop %v1824
    %v1826 = vmul.f32 %v1713, 1.442695
    %v1827 = vpow.pop %v1826
    %v1828 = vmul.f32 %v1714, 1.442695
    %v1829 = vpow.pop %v1828
    %v1830 = vmul.f32 %v1715, 1.442695
    %v1831 = vpow.pop %v1830
    %v1832 = vmul.f32 %v1716, 1.442695
    %v1833 = vpow.pop %v1832
    %v1834 = vmul.f32 %v1717, 1.442695
    %v1835 = vpow.pop %v1834
    %v1836 = vmul.f32 %v1718, 1.442695
    %v1837 = vpow.pop %v1836
    %v1838 = vmul.f32 %v1719, 1.442695
    %v1839 = vpow.pop %v1838
    %v1840 = vmul.f32 %v1720, 1.442695
    %v1841 = vpow.pop %v1840
    %v1842 = vmul.f32 %v1721, 1.442695
    %v1843 = vpow.pop %v1842
    %v1844 = vmul.f32 %v1722, 1.442695
    %v1845 = vpow.pop %v1844
    %v1846 = vmul.f32 %v1723, 1.442695
    %v1847 = vpow.pop %v1846
    %v1848 = vmul.f32 %v1724, 1.442695
    %v1849 = vpow.pop %v1848
    %v1850 = vmul.f32 %v1725, 1.442695
    %v1851 = vpow.pop %v1850
    %v1852 = vmul.f32 %v1726, 1.442695
    %v1853 = vpow.pop %v1852
    %v1854 = vmul.f32 %v1727, 1.442695
    %v1855 = vpow.pop %v1854
    %v1856 = vadd.f32 %v1729, 1.0
    %v1857 = vadd.f32 %v1731, 1.0
    %v1858 = vadd.f32 %v1733, 1.0
    %v1859 = vadd.f32 %v1735, 1.0
    %v1860 = vadd.f32 %v1737, 1.0
    %v1861 = vadd.f32 %v1739, 1.0
    %v1862 = vadd.f32 %v1741, 1.0
    %v1863 = vadd.f32 %v1743, 1.0
    %v1864 = vadd.f32 %v1745, 1.0
    %v1865 = vadd.f32 %v1747, 1.0
    %v1866 = vadd.f32 %v1749, 1.0
    %v1867 = vadd.f32 %v1751, 1.0
    %v1868 = vadd.f32 %v1753, 1.0
    %v1869 = vadd.f32 %v1755, 1.0
    %v1870 = vadd.f32 %v1757, 1.0
    %v1871 = vadd.f32 %v1759, 1.0
    %v1872 = vadd.f32 %v1761, 1.0
    %v1873 = vadd.f32 %v1763, 1.0
    %v1874 = vadd.f32 %v1765, 1.0
    %v1875 = vadd.f32 %v1767, 1.0
    %v1876 = vadd.f32 %v1769, 1.0
    %v1877 = vadd.f32 %v1771, 1.0
    %v1878 = vadd.f32 %v1773, 1.0
    %v1879 = vadd.f32 %v1775, 1.0
    %v1880 = vadd.f32 %v1777, 1.0
    %v1881 = vadd.f32 %v1779, 1.0
    %v1882 = vadd.f32 %v1781, 1.0
    %v1883 = vadd.f32 %v1783, 1.0
    %v1884 = vadd.f32 %v1785, 1.0
    %v1885 = vadd.f32 %v1787, 1.0
    %v1886 = vadd.f32 %v1789, 1.0
    %v1887 = vadd.f32 %v1791, 1.0
    %v1888 = vadd.f32 %v1793, 1.0
    %v1889 = vadd.f32 %v1795, 1.0
    %v1890 = vadd.f32 %v1797, 1.0
    %v1891 = vadd.f32 %v1799, 1.0
    %v1892 = vadd.f32 %v1801, 1.0
    %v1893 = vadd.f32 %v1803, 1.0
    %v1894 = vadd.f32 %v1805, 1.0
    %v1895 = vadd.f32 %v1807, 1.0
    %v1896 = vadd.f32 %v1809, 1.0
    %v1897 = vadd.f32 %v1811, 1.0
    %v1898 = vadd.f32 %v1813, 1.0
    %v1899 = vadd.f32 %v1815, 1.0
    %v1900 = vadd.f32 %v1817, 1.0
    %v1901 = vadd.f32 %v1819, 1.0
    %v1902 = vadd.f32 %v1821, 1.0
    %v1903 = vadd.f32 %v1823, 1.0
    %v1904 = vadd.f32 %v1825, 1.0
    %v1905 = vadd.f32 %v1827, 1.0
    %v1906 = vadd.f32 %v1829, 1.0
    %v1907 = vadd.f32 %v1831, 1.0
    %v1908 = vadd.f32 %v1833, 1.0
    %v1909 = vadd.f32 %v1835, 1.0
    %v1910 = vadd.f32 %v1837, 1.0
    %v1911 = vadd.f32 %v1839, 1.0
    %v1912 = vadd.f32 %v1841, 1.0
    %v1913 = vadd.f32 %v1843, 1.0
    %v1914 = vadd.f32 %v1845, 1.0
    %v1915 = vadd.f32 %v1847, 1.0
    %v1916 = vadd.f32 %v1849, 1.0
    %v1917 = vadd.f32 %v1851, 1.0
    %v1918 = vadd.f32 %v1853, 1.0
    %v1919 = vadd.f32 %v1855, 1.0
    %v1920 = vrcp.pop %v1856
    %v1921 = vrcp.pop %v1857
    %v1922 = vrcp.pop %v1858
    %v1923 = vrcp.pop %v1859
    %v1924 = vrcp.pop %v1860
    %v1925 = vrcp.pop %v1861
    %v1926 = vrcp.pop %v1862
    %v1927 = vrcp.pop %v1863
    %v1928 = vrcp.pop %v1864
    %v1929 = vrcp.pop %v1865
    %v1930 = vrcp.pop %v1866
    %v1931 = vrcp.pop %v1867
    %v1932 = vrcp.pop %v1868
    %v1933 = vrcp.pop %v1869
    %v1934 = vrcp.pop %v1870
    %v1935 = vrcp.pop %v1871
    %v1936 = vrcp.pop %v1872
    %v1937 = vrcp.pop %v1873
    %v1938 = vrcp.pop %v1874
    %v1939 = vrcp.pop %v1875
    %v1940 = vrcp.pop %v1876
    %v1941 = vrcp.pop %v1877
    %v1942 = vrcp.pop %v1878
    %v1943 = vrcp.pop %v1879
    %v1944 = vrcp.pop %v1880
    %v1945 = vrcp.pop %v1881
    %v1946 = vrcp.pop %v1882
    %v1947 = vrcp.pop %v1883
    %v1948 = vrcp.pop %v1884
    %v1949 = vrcp.pop %v1885
    %v1950 = vrcp.pop %v1886
    %v1951 = vrcp.pop %v1887
    %v1952 = vrcp.pop %v1888
    %v1953 = vrcp.pop %v1889
    %v1954 = vrcp.pop %v1890
    %v1955 = vrcp.pop %v1891
    %v1956 = vrcp.pop %v1892
    %v1957 = vrcp.pop %v1893
    %v1958 = vrcp.pop %v1894
    %v1959 = vrcp.pop %v1895
    %v1960 = vrcp.pop %v1896
    %v1961 = vrcp.pop %v1897
    %v1962 = vrcp.pop %v1898
    %v1963 = vrcp.pop %v1899
    %v1964 = vrcp.pop %v1900
    %v1965 = vrcp.pop %v1901
    %v1966 = vrcp.pop %v1902
    %v1967 = vrcp.pop %v1903
    %v1968 = vrcp.pop %v1904
    %v1969 = vrcp.pop %v1905
    %v1970 = vrcp.pop %v1906
    %v1971 = vrcp.pop %v1907
    %v1972 = vrcp.pop %v1908
    %v1973 = vrcp.pop %v1909
    %v1974 = vrcp.pop %v1910
    %v1975 = vrcp.pop %v1911
    %v1976 = vrcp.pop %v1912
    %v1977 = vrcp.pop %v1913
    %v1978 = vrcp.pop %v1914
    %v1979 = vrcp.pop %v1915
    %v1980 = vrcp.pop %v1916
    %v1981 = vrcp.pop %v1917
    %v1982 = vrcp.pop %v1918
    %v1983 = vrcp.pop %v1919
    %vm1984 = vcmask 441344
    %v1985 = vsel %vm1984, %v1154, %v1920
    %v1986 = vsel %vm1984, %v1157, %v1921
    %v1987 = vsel %vm1984, %v1162, %v1922
    %v1988 = vsel %vm1984, %v1165, %v1923
    %v1989 = vsel %vm1984, %v1170, %v1924
    %v1990 = vsel %vm1984, %v1173, %v1925
    %v1991 = vsel %vm1984, %v1178, %v1926
    %v1992 = vsel %vm1984, %v1181, %v1927
    %v1993 = vsel %vm1984, %v1186, %v1928
    %v1994 = vsel %vm1984, %v1189, %v1929
    %v1995 = vsel %vm1984, %v1194, %v1930
    %v1996 = vsel %vm1984, %v1197, %v1931
    %v1997 = vsel %vm1984, %v1202, %v1932
    %v1998 = vsel %vm1984, %v1205, %v1933
    %v1999 = vsel %vm1984, %v1210, %v1934
    %v2000 = vsel %vm1984, %v1213, %v1935
    %v2001 = vsel %vm1984, %v1218, %v1936
    %v2002 = vsel %vm1984, %v1221, %v1937
    %v2003 = vsel %vm1984, %v1226, %v1938
    %v2004 = vsel %vm1984, %v1229, %v1939
    %v2005 = vsel %vm1984, %v1234, %v1940
    %v2006 = vsel %vm1984, %v1237, %v1941
    %v2007 = vsel %vm1984, %v1242, %v1942
    %v2008 = vsel %vm1984, %v1245, %v1943
    %v2009 = vsel %vm1984, %v1250, %v1944
    %v2010 = vsel %vm1984, %v1253, %v1945
    %v2011 = vsel %vm1984, %v1258, %v1946
    %v2012 = vsel %vm1984, %v1261, %v1947
    %v2013 = vsel %vm1984, %v1266, %v1948
    %v2014 = vsel %vm1984, %v1269, %v1949
    %v2015 = vsel %vm1984, %v1274, %v1950
    %v2016 = vsel %vm1984, %v1277, %v1951
    %v2017 = vsel %vm1984, %v1282, %v1952
    %v2018 = vsel %vm1984, %v1285, %v1953
    %v2019 = vsel %vm1984, %v1290, %v1954
    %v2020 = vsel %vm1984, %v1293, %v1955
    %v2021 = vsel %vm1984, %v1298, %v1956
    %v2022 = vsel %vm1984, %v1301, %v1957
    %v2023 = vsel %vm1984, %v1306, %v1958
    %v2024 = vsel %vm1984, %v1309, %v1959
    %v2025 = vsel %vm1984, %v1314, %v1960
    %v2026 = vsel %vm1984, %v1317, %v1961
    %v2027 = vsel %vm1984, %v1322, %v1962
    %v2028 = vsel %vm1984, %v1325, %v1963
    %v2029 = vsel %vm1984, %v1330, %v1964
    %v2030 = vsel %vm1984, %v1333, %v1965
    %v2031 = vsel %vm1984, %v1338, %v1966
    %v2032 = vsel %vm1984, %v1341, %v1967
    %v2033 = vsel %vm1984, %v1346, %v1968
    %v2034 = vsel %vm1984, %v1349, %v1969
    %v2035 = vsel %vm1984, %v1354, %v1970
    %v2036 = vsel %vm1984, %v1357, %v1971
    %v2037 = vsel %vm1984, %v1362, %v1972
    %v2038 = vsel %vm1984, %v1365, %v1973
    %v2039 = vsel %vm1984, %v1370, %v1974
    %v2040 = vsel %vm1984, %v1373, %v1975
    %v2041 = vsel %vm1984, %v1378, %v1976
    %v2042 = vsel %vm1984, %v1381, %v1977
    %v2043 = vsel %vm1984, %v1386, %v1978
    %v2044 = vsel %vm1984, %v1389, %v1979
    %v2045 = vsel %vm1984, %v1394, %v1980
    %v2046 = vsel %vm1984, %v1397, %v1981
    %v2047 = vsel %vm1984, %v1402, %v1982
    %v2048 = vsel %vm1984, %v1405, %v1983
    %vm2049 = vcmask 515072
    %v2050 = vsel %vm2049, %v1985, %v1154
    %v2051 = vsel %vm2049, %v1986, %v1157
    %v2052 = vsel %vm2049, %v1987, %v1162
    %v2053 = vsel %vm2049, %v1988, %v1165
    %v2054 = vsel %vm2049, %v1989, %v1170
    %v2055 = vsel %vm2049, %v1990, %v1173
    %v2056 = vsel %vm2049, %v1991, %v1178
    %v2057 = vsel %vm2049, %v1992, %v1181
    %v2058 = vsel %vm2049, %v1993, %v1186
    %v2059 = vsel %vm2049, %v1994, %v1189
    %v2060 = vsel %vm2049, %v1995, %v1194
    %v2061 = vsel %vm2049, %v1996, %v1197
    %v2062 = vsel %vm2049, %v1997, %v1202
    %v2063 = vsel %vm2049, %v1998, %v1205
    %v2064 = vsel %vm2049, %v1999, %v1210
    %v2065 = vsel %vm2049, %v2000, %v1213
    %v2066 = vsel %vm2049, %v2001, %v1218
    %v2067 = vsel %vm2049, %v2002, %v1221
    %v2068 = vsel %vm2049, %v2003, %v1226
    %v2069 = vsel %vm2049, %v2004, %v1229
    %v2070 = vsel %vm2049, %v2005, %v1234
    %v2071 = vsel %vm2049, %v2006, %v1237
    %v2072 = vsel %vm2049, %v2007, %v1242
    %v2073 = vsel %vm2049, %v2008, %v1245
    %v2074 = vsel %vm2049, %v2009, %v1250
    %v2075 = vsel %vm2049, %v2010, %v1253
    %v2076 = vsel %vm2049, %v2011, %v1258
    %v2077 = vsel %vm2049, %v2012, %v1261
    %v2078 = vsel %vm2049, %v2013, %v1266
    %v2079 = vsel %vm2049, %v2014, %v1269
    %v2080 = vsel %vm2049, %v2015, %v1274
    %v2081 = vsel %vm2049, %v2016, %v1277
    %v2082 = vsel %vm2049, %v2017, %v1282
    %v2083 = vsel %vm2049, %v2018, %v1285
    %v2084 = vsel %vm2049, %v2019, %v1290
    %v2085 = vsel %vm2049, %v2020, %v1293
    %v2086 = vsel %vm2049, %v2021, %v1298
    %v2087 = vsel %vm2049, %v2022, %v1301
    %v2088 = vsel %vm2049, %v2023, %v1306
    %v2089 = vsel %vm2049, %v2024, %v1309
    %v2090 = vsel %vm2049, %v2025, %v1314
    %v2091 = vsel %vm2049, %v2026, %v1317
    %v2092 = vsel %vm2049, %v2027, %v1322
    %v2093 = vsel %vm2049, %v2028, %v1325
    %v2094 = vsel %vm2049, %v2029, %v1330
    %v2095 = vsel %vm2049, %v2030, %v1333
    %v2096 = vsel %vm2049, %v2031, %v1338
    %v2097 = vsel %vm2049, %v2032, %v1341
    %v2098 = vsel %vm2049, %v2033, %v1346
    %v2099 = vsel %vm2049, %v2034, %v1349
    %v2100 = vsel %vm2049, %v2035, %v1354
    %v2101 = vsel %vm2049, %v2036, %v1357
    %v2102 = vsel %vm2049, %v2037, %v1362
    %v2103 = vsel %vm2049, %v2038, %v1365
    %v2104 = vsel %vm2049, %v2039, %v1370
    %v2105 = vsel %vm2049, %v2040, %v1373
    %v2106 = vsel %vm2049, %v2041, %v1378
    %v2107 = vsel %vm2049, %v2042, %v1381
    %v2108 = vsel %vm2049, %v2043, %v1386
    %v2109 = vsel %vm2049, %v2044, %v1389
    %v2110 = vsel %vm2049, %v2045, %v1394
    %v2111 = vsel %vm2049, %v2046, %v1397
    %v2112 = vsel %vm2049, %v2047, %v1402
    %v2113 = vsel %vm2049, %v2048, %v1405
    %2114 = vst [vmem:[#allocation11] sm:$0xff] %v2050
    %2115 = vst [vmem:[#allocation11 + $0x8] sm:$0xff] %v2051
    %2116 = vst [vmem:[#allocation11 + $0x10] sm:$0xff] %v2052
    %2117 = vst [vmem:[#allocation11 + $0x18] sm:$0xff] %v2053
    %2118 = vst [vmem:[#allocation11 + $0x20] sm:$0xff] %v2054
    %2119 = vst [vmem:[#allocation11 + $0x28] sm:$0xff] %v2055
    %2120 = vst [vmem:[#allocation11 + $0x30] sm:$0xff] %v2056
    %2121 = vst [vmem:[#allocation11 + $0x38] sm:$0xff] %v2057
    %2122 = vst [vmem:[#allocation11 + $0x40] sm:$0xff] %v2058
    %2123 = vst [vmem:[#allocation11 + $0x48] sm:$0xff] %v2059
    %2124 = vst [vmem:[#allocation11 + $0x50] sm:$0xff] %v2060
    %2125 = vst [vmem:[#allocation11 + $0x58] sm:$0xff] %v2061
    %2126 = vst [vmem:[#allocation11 + $0x60] sm:$0xff] %v2062
    %2127 = vst [vmem:[#allocation11 + $0x68] sm:$0xff] %v2063
    %2128 = vst [vmem:[#allocation11 + $0x70] sm:$0xff] %v2064
    %2129 = vst [vmem:[#allocation11 + $0x78] sm:$0xff] %v2065
    %2130 = vst [vmem:[#allocation11 + $0x80] sm:$0xff] %v2066
    %2131 = vst [vmem:[#allocation11 + $0x88] sm:$0xff] %v2067
    %2132 = vst [vmem:[#allocation11 + $0x90] sm:$0xff] %v2068
    %2133 = vst [vmem:[#allocation11 + $0x98] sm:$0xff] %v2069
    %2134 = vst [vmem:[#allocation11 + $0xa0] sm:$0xff] %v2070
    %2135 = vst [vmem:[#allocation11 + $0xa8] sm:$0xff] %v2071
    %2136 = vst [vmem:[#allocation11 + $0xb0] sm:$0xff] %v2072
    %2137 = vst [vmem:[#allocation11 + $0xb8] sm:$0xff] %v2073
    %2138 = vst [vmem:[#allocation11 + $0xc0] sm:$0xff] %v2074
    %2139 = vst [vmem:[#allocation11 + $0xc8] sm:$0xff] %v2075
    %2140 = vst [vmem:[#allocation11 + $0xd0] sm:$0xff] %v2076
    %2141 = vst [vmem:[#allocation11 + $0xd8] sm:$0xff] %v2077
    %2142 = vst [vmem:[#allocation11 + $0xe0] sm:$0xff] %v2078
    %2143 = vst [vmem:[#allocation11 + $0xe8] sm:$0xff] %v2079
    %2144 = vst [vmem:[#allocation11 + $0xf0] sm:$0xff] %v2080
    %2145 = vst [vmem:[#allocation11 + $0xf8] sm:$0xff] %v2081
    %2146 = vst [vmem:[#allocation11 + $0x100] sm:$0xff] %v2082
    %2147 = vst [vmem:[#allocation11 + $0x108] sm:$0xff] %v2083
    %2148 = vst [vmem:[#allocation11 + $0x110] sm:$0xff] %v2084
    %2149 = vst [vmem:[#allocation11 + $0x118] sm:$0xff] %v2085
    %2150 = vst [vmem:[#allocation11 + $0x120] sm:$0xff] %v2086
    %2151 = vst [vmem:[#allocation11 + $0x128] sm:$0xff] %v2087
    %2152 = vst [vmem:[#allocation11 + $0x130] sm:$0xff] %v2088
    %2153 = vst [vmem:[#allocation11 + $0x138] sm:$0xff] %v2089
    %2154 = vst [vmem:[#allocation11 + $0x140] sm:$0xff] %v2090
    %2155 = vst [vmem:[#allocation11 + $0x148] sm:$0xff] %v2091
    %2156 = vst [vmem:[#allocation11 + $0x150] sm:$0xff] %v2092
    %2157 = vst [vmem:[#allocation11 + $0x158] sm:$0xff] %v2093
    %2158 = vst [vmem:[#allocation11 + $0x160] sm:$0xff] %v2094
    %2159 = vst [vmem:[#allocation11 + $0x168] sm:$0xff] %v2095
    %2160 = vst [vmem:[#allocation11 + $0x170] sm:$0xff] %v2096
    %2161 = vst [vmem:[#allocation11 + $0x178] sm:$0xff] %v2097
    %2162 = vst [vmem:[#allocation11 + $0x180] sm:$0xff] %v2098
    %2163 = vst [vmem:[#allocation11 + $0x188] sm:$0xff] %v2099
    %2164 = vst [vmem:[#allocation11 + $0x190] sm:$0xff] %v2100
    %2165 = vst [vmem:[#allocation11 + $0x198] sm:$0xff] %v2101
    %2166 = vst [vmem:[#allocation11 + $0x1a0] sm:$0xff] %v2102
    %2167 = vst [vmem:[#allocation11 + $0x1a8] sm:$0xff] %v2103
    %2168 = vst [vmem:[#allocation11 + $0x1b0] sm:$0xff] %v2104
    %2169 = vst [vmem:[#allocation11 + $0x1b8] sm:$0xff] %v2105
    %2170 = vst [vmem:[#allocation11 + $0x1c0] sm:$0xff] %v2106
    %2171 = vst [vmem:[#allocation11 + $0x1c8] sm:$0xff] %v2107
    %2172 = vst [vmem:[#allocation11 + $0x1d0] sm:$0xff] %v2108
    %2173 = vst [vmem:[#allocation11 + $0x1d8] sm:$0xff] %v2109
    %2174 = vst [vmem:[#allocation11 + $0x1e0] sm:$0xff] %v2110
    %2175 = vst [vmem:[#allocation11 + $0x1e8] sm:$0xff] %v2111
    %2176 = vst [vmem:[#allocation11 + $0x1f0] sm:$0xff] %v2112
    %2177 = vst [vmem:[#allocation11 + $0x1f8] sm:$0xff] %v2113
    // Predicated region
    $region42: #{_rpn_compute.1} parent=1 // pred_check
      _
    $region43: #{_rpn_compute.1} parent=1 // pred_check_branch
      %2179 = sbr.rel (0) target = $region45
    $region44: #{_rpn_compute.1} parent=1 // pred_region
      %s2181 = ssub.s32 8192, 8192
      %2182 = vsyncadd [#allocation4], %s2181
      %s2183 = sshll.u32 [#allocation11], 4
      %s2184 = int_to_ptr.vmem [resolvable:$true] %s2183
      %2189 = dma.vmem_to_hbm [thread:$0]  %s2184, 8192, %s5, [#allocation4], 128, 128, 8
    $region45: #{_rpn_compute.1} parent=1 // pred_fallthru
      _
    // Predicated region
    $region46: #{_rpn_compute.1} parent=1 // pred_check
      _
    $region47: #{_rpn_compute.1} parent=1 // pred_check_branch
      %2191 = sbr.rel (0) target = $region49
    $region48: #{_rpn_compute.1} parent=1 // pred_region
      %2192 = dma.done [#allocation4], 8192
    $region49: #{_rpn_compute.1} parent=1 // pred_fallthru
      _
    %2193 = vsyncpa [#allocation3], 1
    %2194 = vsyncpa [#allocation6], 1
    %2195 = vsyncpa [#allocation9], 1
    %2196 = vsyncpa [#allocation4], 1

</llo_original>
